<compile_context>
chip_gen: v5e
topology: v5e:2x2
jax: 0.10.0
libtpu: 0.0.40
codegen_flags: <defaults>
</compile_context>

<pallas_src>
import functools

import jax
import jax.numpy as jnp
from jax.experimental import pallas as pl
from jax.experimental.pallas import tpu as pltpu

TM_MAX = 512                           # rows-of-pixels tile (matmul M)
TN_MAX = 512                           # output-channel tile (matmul N)
VMEM_LIMIT_BYTES = 48 * 1024 * 1024    # > default scoped VMEM, < v7x physical
TAP_VMEM_BUDGET = 28 * 1024 * 1024     # tap-conv falls back to im2col above this


def _round_up(x, m):
    return (x + m - 1) // m * m


def _pick_tn(n_pad):
    if n_pad <= TN_MAX:
        return n_pad
    for tn in (TN_MAX, 256, 128):
        if n_pad % tn == 0:
            return tn
    return 128


def _pick_tm(m):
    """(tm, mp): largest multiple-of-8 tile <= TM_MAX dividing (padded) m."""
    if m <= TM_MAX:
        return m, m                    # single tile == full dim (always legal)
    mp = m if m % 8 == 0 else _round_up(m, 8)
    tm = TM_MAX
    while mp % tm:
        tm -= 8
    return tm, mp


# ---------------------------------------------------------------------------
# Pallas kernels
# ---------------------------------------------------------------------------
def _gemm_kernel(x_ref, w_ref, b_ref, o_ref, *, relu):
    """o = act(X @ W + b); bf16 operands, f32 accumulate, bf16 store."""
    y = jnp.dot(x_ref[...], w_ref[...], preferred_element_type=jnp.float32)
    y = y + b_ref[...]
    if relu:
        y = jnp.maximum(y, 0.0)
    o_ref[...] = y.astype(o_ref.dtype)


def _gemm_res_kernel(x_ref, w_ref, b_ref, r_ref, o_ref, *, relu):
    """Same as _gemm_kernel with the residual add fused before the ReLU."""
    y = jnp.dot(x_ref[...], w_ref[...], preferred_element_type=jnp.float32)
    y = y + b_ref[...] + r_ref[...].astype(jnp.float32)
    if relu:
        y = jnp.maximum(y, 0.0)
    o_ref[...] = y.astype(o_ref.dtype)


def _tap3_kernel(x_ref, w_ref, b_ref, o_ref, *, mv, wp, relu):
    """3x3/stride-1 conv: 9 shifted matmuls over a row-flattened padded image.

    x_ref: (1, F, C)   flattened zero-padded image (F = (H+3)*(W+2))
    w_ref: (9, C, TN)  tap-major folded-BN weights
    o_ref: (1, MV, TN) flat output rows, MV = H*(W+2) (2 junk cols/row)
    """
    acc = None
    for t in range(9):
        kh, kw = divmod(t, 3)
        xt = x_ref[0, pl.ds(kh * wp + kw, mv), :]
        d = jnp.dot(xt, w_ref[t], preferred_element_type=jnp.float32)
        acc = d if acc is None else acc + d
    y = acc + b_ref[...]
    if relu:
        y = jnp.maximum(y, 0.0)
    o_ref[0] = y.astype(o_ref.dtype)


def _maxpool_kernel(ee_ref, eo_ref, oe_ref, oo_ref, o_ref):
    """3x3/stride-2 max pool from four even/odd phase views (bf16, 1 image/step)."""
    _, ho, wo, _ = o_ref.shape
    ee = ee_ref[0]
    eo = eo_ref[0]
    oe = oe_ref[0]
    oo = oo_ref[0]
    m = jnp.maximum(ee[:ho, :wo], ee[:ho, 1:wo + 1])
    m = jnp.maximum(m, ee[1:ho + 1, :wo])
    m = jnp.maximum(m, ee[1:ho + 1, 1:wo + 1])
    m = jnp.maximum(m, eo[:ho, :wo])
    m = jnp.maximum(m, eo[1:ho + 1, :wo])
    m = jnp.maximum(m, oe[:ho, :wo])
    m = jnp.maximum(m, oe[:ho, 1:wo + 1])
    m = jnp.maximum(m, oo[:ho, :wo])
    o_ref[0] = m


# ---------------------------------------------------------------------------
# Conv wrappers
# ---------------------------------------------------------------------------
def _im2col(x, ksize, stride, pad, k_pad):
    """x NHWC -> (N*Ho*Wo, k_pad).  K zero-padding is emitted inside the single
    concatenate (no separate jnp.pad of the patch matrix)."""
    n, h, w, c = x.shape
    if ksize == 1 and pad == 0:
        assert c == k_pad, (c, k_pad)
        xs = x if stride == 1 else x[:, ::stride, ::stride, :]
        _, ho, wo, _ = xs.shape
        return xs.reshape(n * ho * wo, c), (n, ho, wo)
    xp = jnp.pad(x, ((0, 0), (pad, pad), (pad, pad), (0, 0)))
    ho = (h + 2 * pad - ksize) // stride + 1
    wo = (w + 2 * pad - ksize) // stride + 1
    cols = [xp[:, i:i + stride * ho:stride, j:j + stride * wo:stride, :]
            for i in range(ksize) for j in range(ksize)]
    k = ksize * ksize * c
    assert k_pad >= k, (k_pad, k)
    if k_pad > k:
        cols.append(jnp.zeros((n, ho, wo, k_pad - k), x.dtype))
    patches = jnp.concatenate(cols, axis=-1)            # (N, Ho, Wo, k_pad)
    return patches.reshape(n * ho * wo, k_pad), (n, ho, wo)


def conv_gemm(x, p, *, ksize, stride, pad, relu, residual=None):
    """im2col + single-K-block Pallas matmul with folded-BN bias epilogue."""
    w = p["w"]                         # (k_pad, n_pad) bf16, BN scale folded in
    bias = p["b"]                      # (1, n_pad) f32, zero-padded
    k_pad, n_pad = w.shape

    xcols, (n, ho, wo) = _im2col(x, ksize, stride, pad, k_pad)
    m = xcols.shape[0]
    tn = _pick_tn(n_pad)
    tm, mp = _pick_tm(m)
    if mp // tm == 1 and n_pad // tn == 1 and tm % 16 == 0:
        tm //= 2                       # keep both v7x TensorCores busy
    if mp != m:                        # rare fallback (M not 8-aligned & tiled)
        xcols = jnp.pad(xcols, ((0, mp - m), (0, 0)))

    in_specs = [
        pl.BlockSpec((tm, k_pad), lambda i, j: (i, 0)),
        pl.BlockSpec((k_pad, tn), lambda i, j: (0, j)),
        pl.BlockSpec((1, tn), lambda i, j: (0, j)),
    ]
    args = [xcols, w, bias]
    if residual is not None:
        r = residual.reshape(m, n_pad)
        if mp != m:
            r = jnp.pad(r, ((0, mp - m), (0, 0)))
        in_specs.append(pl.BlockSpec((tm, tn), lambda i, j: (i, j)))
        args.append(r)
        kernel = functools.partial(_gemm_res_kernel, relu=relu)
    else:
        kernel = functools.partial(_gemm_kernel, relu=relu)

    out = pl.pallas_call(
        kernel,
        out_shape=jax.ShapeDtypeStruct((mp, n_pad), jnp.bfloat16),
        grid=(mp // tm, n_pad // tn),
        in_specs=in_specs,
        out_specs=pl.BlockSpec((tm, tn), lambda i, j: (i, j)),
        compiler_params=pltpu.CompilerParams(
            dimension_semantics=("parallel", "parallel"),
            vmem_limit_bytes=VMEM_LIMIT_BYTES),
    )(*args)

    if mp != m:
        out = out[:m]
    return out.reshape(n, ho, wo, n_pad)


def conv3x3_s1(x, p, *, relu):
    """Stride-1 3x3 conv without im2col (tap accumulation over a flat image)."""
    n, h, w, c = x.shape
    wt = p["w"]                        # (9, c, n_pad) bf16
    bias = p["b"]                      # (1, n_pad) f32
    assert wt.shape[1] == c, (wt.shape, c)
    n_pad = wt.shape[2]
    wp = w + 2
    mv = h * wp                        # flat output rows (2 junk cols per row)
    f = (h + 3) * wp                   # flat padded rows (extra bottom row covers
                                       # the tap over-read of the junk columns)
    tn = _pick_tn(n_pad)

    est = (2 * f * c + 2 * 9 * c * tn + 2 * mv * tn + 2 * mv * c) * 2 + mv * tn * 4
    if est > TAP_VMEM_BUDGET:
        # TODO(synk): row-tiled tap conv (halo via pl.Element offsets or manual
        # DMA) would avoid this im2col fallback for detection-scale inputs.
        return conv_gemm(x, {"w": wt.reshape(9 * c, n_pad), "b": bias},
                         ksize=3, stride=1, pad=1, relu=relu)

    xp = jnp.pad(x, ((0, 0), (1, 2), (1, 1), (0, 0))).reshape(n, f, c)
    out = pl.pallas_call(
        functools.partial(_tap3_kernel, mv=mv, wp=wp, relu=relu),
        out_shape=jax.ShapeDtypeStruct((n, mv, n_pad), jnp.bfloat16),
        grid=(n, n_pad // tn),
        in_specs=[
            pl.BlockSpec((1, f, c), lambda b, j: (b, 0, 0)),
            pl.BlockSpec((9, c, tn), lambda b, j: (0, 0, j)),
            pl.BlockSpec((1, tn), lambda b, j: (0, j)),
        ],
        out_specs=pl.BlockSpec((1, mv, tn), lambda b, j: (b, 0, j)),
        compiler_params=pltpu.CompilerParams(
            dimension_semantics=("parallel", "parallel"),
            vmem_limit_bytes=VMEM_LIMIT_BYTES),
    )(xp, wt, bias)
    # drop the 2 junk (row-wrap) columns per output row
    return out.reshape(n, h, wp, n_pad)[:, :, :w, :]


def maxpool_3x3_s2_p1(x):
    """PyTorch MaxPool2d(kernel_size=3, stride=2, padding=1) on NHWC bf16."""
    n, h, w, c = x.shape
    assert h % 2 == 0 and w % 2 == 0
    ho, wo = h // 2, w // 2
    neg = jnp.asarray(-jnp.inf, x.dtype)
    xp = jnp.pad(x, ((0, 0), (1, 1), (1, 1), (0, 0)), constant_values=neg)
    # Even/odd phase split: total HBM read ~= input size (no 9x window stack).
    ee = xp[:, 0::2, 0::2, :]          # (n, ho+1, wo+1, c)
    eo = xp[:, 0::2, 1::2, :]
    oe = xp[:, 1::2, 0::2, :]
    oo = xp[:, 1::2, 1::2, :]
    phase_block = (1,) + ee.shape[1:]
    # TODO(synk): row-block the grid (or write conv1's output pre-phase-split)
    # for detection-scale inputs; one image per grid step is fine at these sizes.
    return pl.pallas_call(
        _maxpool_kernel,
        out_shape=jax.ShapeDtypeStruct((n, ho, wo, c), x.dtype),
        grid=(n,),
        in_specs=[pl.BlockSpec(phase_block, lambda i: (i, 0, 0, 0))] * 4,
        out_specs=pl.BlockSpec((1, ho, wo, c), lambda i: (i, 0, 0, 0)),
        compiler_params=pltpu.CompilerParams(
            dimension_semantics=("parallel",),
            vmem_limit_bytes=VMEM_LIMIT_BYTES),
    )(ee, eo, oe, oo)


# ---------------------------------------------------------------------------
# Deterministic synthetic parameters (shapes follow torchvision resnet50),
# pre-packed for the kernels: BN folded, channels / K padded to 128 multiples.
# ---------------------------------------------------------------------------
def _init_conv_bn(key, cin, cout, ksize, *, cin_pad, layout="gemm"):
    k1, k2, k3, k4, k5 = jax.random.split(key, 5)
    fan_in = cin * ksize * ksize
    w = jax.random.normal(k1, (ksize, ksize, cin, cout), jnp.float32)
    w = w * jnp.sqrt(2.0 / fan_in)
    gamma = 1.0 + 0.05 * jax.random.normal(k2, (cout,), jnp.float32)
    beta = 0.05 * jax.random.normal(k3, (cout,), jnp.float32)
    mean = 0.05 * jax.random.normal(k4, (cout,), jnp.float32)
    var = 1.0 + 0.05 * jax.random.uniform(k5, (cout,), jnp.float32)
    scale = gamma * jax.lax.rsqrt(var + 1e-5)      # folded inference BatchNorm
    bias = beta - mean * scale

    cout_pad = _round_up(cout, 128)
    wfold = w * scale                              # fold BN scale into weights
    wfull = jnp.zeros((ksize, ksize, cin_pad, cout_pad), jnp.float32)
    wfull = wfull.at[:, :, :cin, :cout].set(wfold)
    if layout == "tap3":
        assert ksize == 3
        wm = wfull.reshape(9, cin_pad, cout_pad).astype(jnp.bfloat16)
    else:
        k = ksize * ksize * cin_pad
        k_pad = _round_up(k, 128)
        wm = jnp.zeros((k_pad, cout_pad), jnp.float32)
        wm = wm.at[:k, :].set(wfull.reshape(k, cout_pad)).astype(jnp.bfloat16)
    bfull = jnp.zeros((1, cout_pad), jnp.float32).at[0, :cout].set(bias)
    return {"w": wm, "b": bfull}


def make_resnet50_params(key):
    layers = [3, 4, 6, 3]
    planes_per_layer = [64, 128, 256, 512]
    expansion = 4
    keys = iter(jax.random.split(key, 256))
    params = {"conv1": _init_conv_bn(next(keys), 3, 64, 7, cin_pad=3)}
    inplanes = 64
    for li, (blocks, planes) in enumerate(zip(layers, planes_per_layer)):
        layer_stride = 1 if li == 0 else 2
        layer = []
        for b in range(blocks):
            s = layer_stride if b == 0 else 1
            in_pad = _round_up(inplanes, 128)
            mid_pad = _round_up(planes, 128)
            blk = {}
            if s != 1 or inplanes != planes * expansion:
                blk["downsample"] = _init_conv_bn(next(keys), inplanes,
                                                  planes * expansion, 1,
                                                  cin_pad=in_pad)
            blk["conv1"] = _init_conv_bn(next(keys), inplanes, planes, 1,
                                         cin_pad=in_pad)
            blk["conv2"] = _init_conv_bn(next(keys), planes, planes, 3,
                                         cin_pad=mid_pad,
                                         layout="tap3" if s == 1 else "gemm")
            blk["conv3"] = _init_conv_bn(next(keys), planes, planes * expansion,
                                         1, cin_pad=mid_pad)
            layer.append(blk)
            inplanes = planes * expansion
        params[f"layer{li + 1}"] = layer
    return params


# ---------------------------------------------------------------------------
# Forward pass (matches Resnet.forward for backbone='resnet50',
# coco='', input_extra=0, pre_down=post_down=None)
# ---------------------------------------------------------------------------
def resnet_forward(params, x_nchw):
    x = jnp.transpose(x_nchw, (0, 2, 3, 1)).astype(jnp.bfloat16)  # NCHW->NHWC bf16
    x = conv_gemm(x, params["conv1"], ksize=7, stride=2, pad=3, relu=True)
    x = maxpool_3x3_s2_p1(x)

    features = []
    for li in range(4):
        layer = params[f"layer{li + 1}"]
        for bi, blk in enumerate(layer):
            s = 2 if (li > 0 and bi == 0) else 1      # stride lives in conv2
            identity = x
            out = conv_gemm(x, blk["conv1"], ksize=1, stride=1, pad=0, relu=True)
            if s == 1:
                out = conv3x3_s1(out, blk["conv2"], relu=True)
            else:
                out = conv_gemm(out, blk["conv2"], ksize=3, stride=2, pad=1,
                                relu=True)
            if "downsample" in blk:
                identity = conv_gemm(x, blk["downsample"], ksize=1, stride=s,
                                     pad=0, relu=False)
            x = conv_gemm(out, blk["conv3"], ksize=1, stride=1, pad=0, relu=True,
                          residual=identity)
        # Interface glue: NCHW / f32 to match the torch module (feature channel
        # counts 256/512/1024/2048 are already 128-aligned, so no slicing).
        features.append(jnp.transpose(x, (0, 3, 1, 2)).astype(jnp.float32))
    return features


# ---------------------------------------------------------------------------
# Self-test of the new tap-based 3x3 conv against lax.conv (loose bf16 tol).
# ---------------------------------------------------------------------------
def _selftest_tap_conv():
    key = jax.random.PRNGKey(42)
    k1, k2 = jax.random.split(key)
    p = _init_conv_bn(k1, 64, 64, 3, cin_pad=128, layout="tap3")
    x = jax.random.normal(k2, (2, 8, 8, 128), jnp.float32).astype(jnp.bfloat16)
    got = jax.jit(lambda xx: conv3x3_s1(xx, p, relu=True))(x)
    wf = p["w"].astype(jnp.float32).reshape(3, 3, 128, 128)
    ref = jax.lax.conv_general_dilated(
        x.astype(jnp.float32), wf, (1, 1), ((1, 1), (1, 1)),
        dimension_numbers=("NHWC", "HWIO", "NHWC"),
        precision=jax.lax.Precision.HIGHEST)
    ref = jnp.maximum(ref + p["b"].reshape(1, 1, 1, -1), 0.0)
    err = float(jnp.max(jnp.abs(got.astype(jnp.float32) - ref)))
    assert err < 0.25, f"tap conv mismatch: max abs err {err}"


if __name__ == "__main__":
    _selftest_tap_conv()

    key = jax.random.PRNGKey(0)
    kp, kx = jax.random.split(key)
    params = make_resnet50_params(kp)

    # small input: batch=2, 3 channels, 64x64 spatial
    x = jax.random.normal(kx, (2, 3, 64, 64), jnp.float32)

    feats = jax.jit(resnet_forward)(params, x)
    feats = jax.block_until_ready(feats)

    expected = [(2, 256, 16, 16), (2, 512, 8, 8), (2, 1024, 4, 4), (2, 2048, 2, 2)]
    got = [tuple(f.shape) for f in feats]
    assert got == expected, (got, expected)
    assert all(bool(jnp.isfinite(f).all()) for f in feats)
    print("KERNEL_OK")
</pallas_src>

<mosaic_0001>
module attributes {stable_mosaic.version = 11 : i64} {
  func.func @_tap3_kernel(%arg0: i32, %arg1: i32, %arg2: memref<1x110x128xbf16, #tpu.memory_space<vmem>>, %arg3: memref<9x128x128xbf16, #tpu.memory_space<vmem>>, %arg4: memref<1x128xf32, #tpu.memory_space<vmem>>, %arg5: memref<1x80x128xbf16, #tpu.memory_space<vmem>>) attributes {dimension_semantics = [#tpu.dimension_semantics<parallel>, #tpu.dimension_semantics<parallel>], iteration_bounds = array<i64: 2, 1>, scalar_prefetch = 0 : i64, scratch_operands = 0 : i64, tpu.core_type = #tpu.core_type<tc>, window_params = [{transform_indices = @transform_0, window_bounds = array<i64: 1, 110, 128>}, {transform_indices = @transform_1, window_bounds = array<i64: 9, 128, 128>}, {transform_indices = @transform_2, window_bounds = array<i64: 1, 128>}, {transform_indices = @transform_3, window_bounds = array<i64: 1, 80, 128>}]} {
    %c0 = arith.constant 0 : index
    %c0_0 = arith.constant 0 : index
    %c0_1 = arith.constant 0 : index
    %0 = vector.load %arg2[%c0, %c0_0, %c0_1] : memref<1x110x128xbf16, #tpu.memory_space<vmem>>, vector<1x80x128xbf16>
    %1 = vector.shape_cast %0 : vector<1x80x128xbf16> to vector<80x128xbf16>
    %c0_2 = arith.constant 0 : index
    %c0_3 = arith.constant 0 : index
    %c0_4 = arith.constant 0 : index
    %2 = vector.load %arg3[%c0_2, %c0_3, %c0_4] : memref<9x128x128xbf16, #tpu.memory_space<vmem>>, vector<1x128x128xbf16>
    %3 = vector.shape_cast %2 : vector<1x128x128xbf16> to vector<128x128xbf16>
    %cst = arith.constant dense<0.000000e+00> : vector<80x128xf32>
    %4 = tpu.matmul %1, %3, %cst {dimension_numbers = #tpu.dot_dimension_numbers<[1], [0], [0], [1], [0, 0, 1, 1], [], []>} : vector<80x128xbf16>, vector<128x128xbf16>, vector<80x128xf32> -> vector<80x128xf32>
    %c0_5 = arith.constant 0 : index
    %c1 = arith.constant 1 : index
    %c0_6 = arith.constant 0 : index
    %5 = vector.load %arg2[%c0_5, %c1, %c0_6] : memref<1x110x128xbf16, #tpu.memory_space<vmem>>, vector<1x80x128xbf16>
    %6 = vector.shape_cast %5 : vector<1x80x128xbf16> to vector<80x128xbf16>
    %c1_7 = arith.constant 1 : index
    %c0_8 = arith.constant 0 : index
    %c0_9 = arith.constant 0 : index
    %7 = vector.load %arg3[%c1_7, %c0_8, %c0_9] : memref<9x128x128xbf16, #tpu.memory_space<vmem>>, vector<1x128x128xbf16>
    %8 = vector.shape_cast %7 : vector<1x128x128xbf16> to vector<128x128xbf16>
    %cst_10 = arith.constant dense<0.000000e+00> : vector<80x128xf32>
    %9 = tpu.matmul %6, %8, %cst_10 {dimension_numbers = #tpu.dot_dimension_numbers<[1], [0], [0], [1], [0, 0, 1, 1], [], []>} : vector<80x128xbf16>, vector<128x128xbf16>, vector<80x128xf32> -> vector<80x128xf32>
    %10 = arith.addf %4, %9 : vector<80x128xf32>
    %c0_11 = arith.constant 0 : index
    %c2 = arith.constant 2 : index
    %c0_12 = arith.constant 0 : index
    %11 = vector.load %arg2[%c0_11, %c2, %c0_12] : memref<1x110x128xbf16, #tpu.memory_space<vmem>>, vector<1x80x128xbf16>
    %12 = vector.shape_cast %11 : vector<1x80x128xbf16> to vector<80x128xbf16>
    %c2_13 = arith.constant 2 : index
    %c0_14 = arith.constant 0 : index
    %c0_15 = arith.constant 0 : index
    %13 = vector.load %arg3[%c2_13, %c0_14, %c0_15] : memref<9x128x128xbf16, #tpu.memory_space<vmem>>, vector<1x128x128xbf16>
    %14 = vector.shape_cast %13 : vector<1x128x128xbf16> to vector<128x128xbf16>
    %cst_16 = arith.constant dense<0.000000e+00> : vector<80x128xf32>
    %15 = tpu.matmul %12, %14, %cst_16 {dimension_numbers = #tpu.dot_dimension_numbers<[1], [0], [0], [1], [0, 0, 1, 1], [], []>} : vector<80x128xbf16>, vector<128x128xbf16>, vector<80x128xf32> -> vector<80x128xf32>
    %16 = arith.addf %10, %15 : vector<80x128xf32>
    %c0_17 = arith.constant 0 : index
    %c10 = arith.constant 10 : index
    %c0_18 = arith.constant 0 : index
    %17 = vector.load %arg2[%c0_17, %c10, %c0_18] : memref<1x110x128xbf16, #tpu.memory_space<vmem>>, vector<1x80x128xbf16>
    %18 = vector.shape_cast %17 : vector<1x80x128xbf16> to vector<80x128xbf16>
    %c3 = arith.constant 3 : index
    %c0_19 = arith.constant 0 : index
    %c0_20 = arith.constant 0 : index
    %19 = vector.load %arg3[%c3, %c0_19, %c0_20] : memref<9x128x128xbf16, #tpu.memory_space<vmem>>, vector<1x128x128xbf16>
    %20 = vector.shape_cast %19 : vector<1x128x128xbf16> to vector<128x128xbf16>
    %cst_21 = arith.constant dense<0.000000e+00> : vector<80x128xf32>
    %21 = tpu.matmul %18, %20, %cst_21 {dimension_numbers = #tpu.dot_dimension_numbers<[1], [0], [0], [1], [0, 0, 1, 1], [], []>} : vector<80x128xbf16>, vector<128x128xbf16>, vector<80x128xf32> -> vector<80x128xf32>
    %22 = arith.addf %16, %21 : vector<80x128xf32>
    %c0_22 = arith.constant 0 : index
    %c11 = arith.constant 11 : index
    %c0_23 = arith.constant 0 : index
    %23 = vector.load %arg2[%c0_22, %c11, %c0_23] : memref<1x110x128xbf16, #tpu.memory_space<vmem>>, vector<1x80x128xbf16>
    %24 = vector.shape_cast %23 : vector<1x80x128xbf16> to vector<80x128xbf16>
    %c4 = arith.constant 4 : index
    %c0_24 = arith.constant 0 : index
    %c0_25 = arith.constant 0 : index
    %25 = vector.load %arg3[%c4, %c0_24, %c0_25] : memref<9x128x128xbf16, #tpu.memory_space<vmem>>, vector<1x128x128xbf16>
    %26 = vector.shape_cast %25 : vector<1x128x128xbf16> to vector<128x128xbf16>
    %cst_26 = arith.constant dense<0.000000e+00> : vector<80x128xf32>
    %27 = tpu.matmul %24, %26, %cst_26 {dimension_numbers = #tpu.dot_dimension_numbers<[1], [0], [0], [1], [0, 0, 1, 1], [], []>} : vector<80x128xbf16>, vector<128x128xbf16>, vector<80x128xf32> -> vector<80x128xf32>
    %28 = arith.addf %22, %27 : vector<80x128xf32>
    %c0_27 = arith.constant 0 : index
    %c12 = arith.constant 12 : index
    %c0_28 = arith.constant 0 : index
    %29 = vector.load %arg2[%c0_27, %c12, %c0_28] : memref<1x110x128xbf16, #tpu.memory_space<vmem>>, vector<1x80x128xbf16>
    %30 = vector.shape_cast %29 : vector<1x80x128xbf16> to vector<80x128xbf16>
    %c5 = arith.constant 5 : index
    %c0_29 = arith.constant 0 : index
    %c0_30 = arith.constant 0 : index
    %31 = vector.load %arg3[%c5, %c0_29, %c0_30] : memref<9x128x128xbf16, #tpu.memory_space<vmem>>, vector<1x128x128xbf16>
    %32 = vector.shape_cast %31 : vector<1x128x128xbf16> to vector<128x128xbf16>
    %cst_31 = arith.constant dense<0.000000e+00> : vector<80x128xf32>
    %33 = tpu.matmul %30, %32, %cst_31 {dimension_numbers = #tpu.dot_dimension_numbers<[1], [0], [0], [1], [0, 0, 1, 1], [], []>} : vector<80x128xbf16>, vector<128x128xbf16>, vector<80x128xf32> -> vector<80x128xf32>
    %34 = arith.addf %28, %33 : vector<80x128xf32>
    %c0_32 = arith.constant 0 : index
    %c20 = arith.constant 20 : index
    %c0_33 = arith.constant 0 : index
    %35 = vector.load %arg2[%c0_32, %c20, %c0_33] : memref<1x110x128xbf16, #tpu.memory_space<vmem>>, vector<1x80x128xbf16>
    %36 = vector.shape_cast %35 : vector<1x80x128xbf16> to vector<80x128xbf16>
    %c6 = arith.constant 6 : index
    %c0_34 = arith.constant 0 : index
    %c0_35 = arith.constant 0 : index
    %37 = vector.load %arg3[%c6, %c0_34, %c0_35] : memref<9x128x128xbf16, #tpu.memory_space<vmem>>, vector<1x128x128xbf16>
    %38 = vector.shape_cast %37 : vector<1x128x128xbf16> to vector<128x128xbf16>
    %cst_36 = arith.constant dense<0.000000e+00> : vector<80x128xf32>
    %39 = tpu.matmul %36, %38, %cst_36 {dimension_numbers = #tpu.dot_dimension_numbers<[1], [0], [0], [1], [0, 0, 1, 1], [], []>} : vector<80x128xbf16>, vector<128x128xbf16>, vector<80x128xf32> -> vector<80x128xf32>
    %40 = arith.addf %34, %39 : vector<80x128xf32>
    %c0_37 = arith.constant 0 : index
    %c21 = arith.constant 21 : index
    %c0_38 = arith.constant 0 : index
    %41 = vector.load %arg2[%c0_37, %c21, %c0_38] : memref<1x110x128xbf16, #tpu.memory_space<vmem>>, vector<1x80x128xbf16>
    %42 = vector.shape_cast %41 : vector<1x80x128xbf16> to vector<80x128xbf16>
    %c7 = arith.constant 7 : index
    %c0_39 = arith.constant 0 : index
    %c0_40 = arith.constant 0 : index
    %43 = vector.load %arg3[%c7, %c0_39, %c0_40] : memref<9x128x128xbf16, #tpu.memory_space<vmem>>, vector<1x128x128xbf16>
    %44 = vector.shape_cast %43 : vector<1x128x128xbf16> to vector<128x128xbf16>
    %cst_41 = arith.constant dense<0.000000e+00> : vector<80x128xf32>
    %45 = tpu.matmul %42, %44, %cst_41 {dimension_numbers = #tpu.dot_dimension_numbers<[1], [0], [0], [1], [0, 0, 1, 1], [], []>} : vector<80x128xbf16>, vector<128x128xbf16>, vector<80x128xf32> -> vector<80x128xf32>
    %46 = arith.addf %40, %45 : vector<80x128xf32>
    %c0_42 = arith.constant 0 : index
    %c22 = arith.constant 22 : index
    %c0_43 = arith.constant 0 : index
    %47 = vector.load %arg2[%c0_42, %c22, %c0_43] : memref<1x110x128xbf16, #tpu.memory_space<vmem>>, vector<1x80x128xbf16>
    %48 = vector.shape_cast %47 : vector<1x80x128xbf16> to vector<80x128xbf16>
    %c8 = arith.constant 8 : index
    %c0_44 = arith.constant 0 : index
    %c0_45 = arith.constant 0 : index
    %49 = vector.load %arg3[%c8, %c0_44, %c0_45] : memref<9x128x128xbf16, #tpu.memory_space<vmem>>, vector<1x128x128xbf16>
    %50 = vector.shape_cast %49 : vector<1x128x128xbf16> to vector<128x128xbf16>
    %cst_46 = arith.constant dense<0.000000e+00> : vector<80x128xf32>
    %51 = tpu.matmul %48, %50, %cst_46 {dimension_numbers = #tpu.dot_dimension_numbers<[1], [0], [0], [1], [0, 0, 1, 1], [], []>} : vector<80x128xbf16>, vector<128x128xbf16>, vector<80x128xf32> -> vector<80x128xf32>
    %52 = arith.addf %46, %51 : vector<80x128xf32>
    %c0_47 = arith.constant 0 : index
    %c0_48 = arith.constant 0 : index
    %53 = vector.load %arg4[%c0_47, %c0_48] : memref<1x128xf32, #tpu.memory_space<vmem>>, vector<1x128xf32>
    %54 = vector.broadcast %53 : vector<1x128xf32> to vector<80x128xf32>
    %55 = arith.addf %52, %54 : vector<80x128xf32>
    %cst_49 = arith.constant 0.000000e+00 : f32
    %56 = vector.broadcast %cst_49 : f32 to vector<80x128xf32>
    %57 = arith.maximumf %55, %56 : vector<80x128xf32>
    %58 = arith.truncf %57 : vector<80x128xf32> to vector<80x128xbf16>
    %c0_50 = arith.constant 0 : index
    %c0_51 = arith.constant 0 : index
    %c0_52 = arith.constant 0 : index
    %59 = vector.load %arg5[%c0_50, %c0_51, %c0_52] : memref<1x80x128xbf16, #tpu.memory_space<vmem>>, vector<1x80x128xbf16>
    %60 = vector.shape_cast %59 : vector<1x80x128xbf16> to vector<80x128xbf16>
    %61 = vector.shape_cast %58 : vector<80x128xbf16> to vector<1x80x128xbf16>
    tpu.vector_store %arg5[%c0_50, %c0_51, %c0_52], %61 {strides = array<i32>} : memref<1x80x128xbf16, #tpu.memory_space<vmem>>, vector<1x80x128xbf16>,
    return
  }
  func.func @transform_0(%arg0: i32, %arg1: i32) -> (i32, i32, i32) {
    %c0_i32 = arith.constant 0 : i32
    %c0_i32_0 = arith.constant 0 : i32
    %c0_i32_1 = arith.constant 0 : i32
    return %arg0, %c0_i32, %c0_i32_0 : i32, i32, i32
  }
  func.func @transform_1(%arg0: i32, %arg1: i32) -> (i32, i32, i32) {
    %c0_i32 = arith.constant 0 : i32
    %c0_i32_0 = arith.constant 0 : i32
    %c0_i32_1 = arith.constant 0 : i32
    return %c0_i32, %c0_i32_0, %arg1 : i32, i32, i32
  }
  func.func @transform_2(%arg0: i32, %arg1: i32) -> (i32, i32) {
    %c0_i32 = arith.constant 0 : i32
    %c0_i32_0 = arith.constant 0 : i32
    return %c0_i32, %arg1 : i32, i32
  }
  func.func @transform_3(%arg0: i32, %arg1: i32) -> (i32, i32, i32) {
    %c0_i32 = arith.constant 0 : i32
    %c0_i32_0 = arith.constant 0 : i32
    return %arg0, %c0_i32, %arg1 : i32, i32, i32
  }
}

</mosaic_0001>

<llo_original>
// kernel: _lambda_.1
$region0: #{_lambda_.1}
  #allocation0 [shape = 'u32[]', space=smem, size = 0x4, offset = 0x4, fixed_abs, tag = 'smem constant byte address 0x4 - core index']
  #allocation1 [shape = 'u32[72,128]{1,0:T(1,128)}', space=vmem, size = 0x9000, scoped, tag = 'internal scratch']
  %s0 = inlined_call_operand.vmem [shape: bf16[2,110,128], index: 0, kind: input, shape index: {}]
  %s1 = inlined_call_operand.hbm [shape: bf16[9,128,128], index: 1, kind: input, shape index: {}]
  %s2 = inlined_call_operand.vmem [shape: f32[1,128], index: 2, kind: input, shape index: {}]
  %s3 = inlined_call_operand.vmem [shape: bf16[2,80,128], index: 3, kind: output, shape index: {}]
  %s4 = sld [smem:[#allocation0]]
  $region49: #{_lambda_.1} parent=0
    _
  %s6 = ssub.s32 1, %s4
  %s7 = scalar_select 0, %s6, %s4
  $region1: #{_lambda_.1} parent=0
    #allocation2 [shape = 'u8[294912]{0}', space=vmem, size = 0x48000, scoped, tag = 'input window, operand 1, single buffered']
    #allocation3 [shape = 's32[2]{0}', space=sflag, size = 0x8, scoped, tag = 'scoped memory for _lambda_.1']
    %8 = vsyncpa [#allocation3], 0
    loop: start=0, step=1, limit=4
    $region2: #{_lambda_.1} parent=1 // loop_pre_header
      _
    $region3: #{_lambda_.1} parent=1 // loop_header
      %s10 = sphi 0, %s14
      %p11 = scmp.ge.s32.totalorder %s10, 4
      %s17 = sphi 0, %s29
      %s18 = sphi 0, %s25
      %s19 = sphi 0, %s17
      %s20 = sphi 0, %s18
      %s21 = sphi 0, %s19
      %s22 = sphi 0, %s20
      %s32 = sphi 0, %s34
      %s35 = sphi 0, %s32
      %s36 = sphi 0, %s35
      %s52 = sphi 0, %s36
      %s58 = sphi 0, %s60
      %s61 = sphi 0, %s58
      %s62 = sphi 0, %s61
      %s78 = sphi 0, %s62
      %s84 = sphi 0, %s86
      %s87 = sphi 0, %s84
      %s88 = sphi 0, %s87
      %s104 = sphi 0, %s88
      %s112 = sphi 0, %s114
      %s115 = sphi 0, %s112
      %s116 = sphi 0, %s115
      %s132 = sphi 0, %s116
    $region4: #{_lambda_.1} parent=1 // loop_header_branch
      %13 = sbr.rel (%p11) target = $region8
    $region5: #{_lambda_.1} parent=1 // loop_body
      %s15 = ssub.s32 %s10, 1
      %s16 = ssub.s32 %s10, 2
      %s23 = sadd.s32 1, %s18
      %p24 = scmp.ge.s32.totalorder %s23, 1
      %s25 = scalar_select %p24, 0, %s23
      %s26 = sadd.s32 1, %s17
      %s27 = scalar_select %p24, %s26, %s17
      %p28 = scmp.ge.s32.totalorder %s27, 2
      %s29 = scalar_select %p28, 0, %s27
      %s30 = ssub.s32 %s17, %s29
      %p31 = scmp.eq.s32.totalorder %s30, 0
      %s33 = sadd.s32 %s32, 1
      %s34 = scalar_select %p31, %s32, %s33
      %p37 = pneg %p31
      %p38 = scmp.eq.s32.totalorder %s10, 1
      %p39 = por %p37, %p38
      %p40 = scmp.ne.s32.totalorder %s32, %s35
      %p41 = scmp.eq.s32.totalorder %s10, 0
      %p42 = por %p40, %p41
      %p43 = scmp.ne.s32.totalorder %s32, %s35
      %p44 = scmp.eq.s32.totalorder %s15, 1
      %p45 = por %p43, %p44
      %p46 = scmp.ne.s32.totalorder %s35, %s36
      %p47 = scmp.eq.s32.totalorder %s15, 0
      %p48 = por %p46, %p47
      %p49 = scmp.ne.s32.totalorder %s35, %s36
      %p50 = scmp.eq.s32.totalorder %s16, 1
      %p51 = por %p49, %p50
      %p53 = scmp.ne.s32.totalorder %s36, %s52
      %p54 = scmp.eq.s32.totalorder %s16, 0
      %p55 = por %p53, %p54
      %s56 = ssub.s32 %s18, %s25
      %p57 = scmp.eq.s32.totalorder %s56, 0
      %s59 = sadd.s32 %s58, 1
      %s60 = scalar_select %p57, %s58, %s59
      %p63 = pneg %p57
      %p64 = scmp.eq.s32.totalorder %s10, 1
      %p65 = por %p63, %p64
      %p66 = scmp.ne.s32.totalorder %s58, %s61
      %p67 = scmp.eq.s32.totalorder %s10, 0
      %p68 = por %p66, %p67
      %p69 = scmp.ne.s32.totalorder %s58, %s61
      %p70 = scmp.eq.s32.totalorder %s15, 1
      %p71 = por %p69, %p70
      %p72 = scmp.ne.s32.totalorder %s61, %s62
      %p73 = scmp.eq.s32.totalorder %s15, 0
      %p74 = por %p72, %p73
      %p75 = scmp.ne.s32.totalorder %s61, %s62
      %p76 = scmp.eq.s32.totalorder %s16, 1
      %p77 = por %p75, %p76
      %p79 = scmp.ne.s32.totalorder %s62, %s78
      %p80 = scmp.eq.s32.totalorder %s16, 0
      %p81 = por %p79, %p80
      %s82 = ssub.s32 %s18, %s25
      %p83 = scmp.eq.s32.totalorder %s82, 0
      %s85 = sadd.s32 %s84, 1
      %s86 = scalar_select %p83, %s84, %s85
      %p89 = pneg %p83
      %p90 = scmp.eq.s32.totalorder %s10, 1
      %p91 = por %p89, %p90
      %p92 = scmp.ne.s32.totalorder %s84, %s87
      %p93 = scmp.eq.s32.totalorder %s10, 0
      %p94 = por %p92, %p93
      %p95 = scmp.ne.s32.totalorder %s84, %s87
      %p96 = scmp.eq.s32.totalorder %s15, 1
      %p97 = por %p95, %p96
      %p98 = scmp.ne.s32.totalorder %s87, %s88
      %p99 = scmp.eq.s32.totalorder %s15, 0
      %p100 = por %p98, %p99
      %p101 = scmp.ne.s32.totalorder %s87, %s88
      %p102 = scmp.eq.s32.totalorder %s16, 1
      %p103 = por %p101, %p102
      %p105 = scmp.ne.s32.totalorder %s88, %s104
      %p106 = scmp.eq.s32.totalorder %s16, 0
      %p107 = por %p105, %p106
      %s108 = ssub.s32 %s17, %s29
      %s109 = ssub.s32 %s18, %s25
      %s110 = sor.u32 %s108, %s109
      %p111 = scmp.eq.s32.totalorder %s110, 0
      %s113 = sadd.s32 %s112, 1
      %s114 = scalar_select %p111, %s112, %s113
      %p117 = pneg %p111
      %p118 = scmp.eq.s32.totalorder %s10, 1
      %p119 = por %p117, %p118
      %p120 = scmp.ne.s32.totalorder %s112, %s115
      %p121 = scmp.eq.s32.totalorder %s10, 0
      %p122 = por %p120, %p121
      %p123 = scmp.ne.s32.totalorder %s112, %s115
      %p124 = scmp.eq.s32.totalorder %s15, 1
      %p125 = por %p123, %p124
      %p126 = scmp.ne.s32.totalorder %s115, %s116
      %p127 = scmp.eq.s32.totalorder %s15, 0
      %p128 = por %p126, %p127
      %p129 = scmp.ne.s32.totalorder %s115, %s116
      %p130 = scmp.eq.s32.totalorder %s16, 1
      %p131 = por %p129, %p130
      %p133 = scmp.ne.s32.totalorder %s116, %s132
      %p134 = scmp.eq.s32.totalorder %s16, 0
      %p135 = por %p133, %p134
      %p136 = scmp.le.s32.totalorder 1, %s10
      %p137 = scmp.lt.s32.totalorder %s10, 3
      %p138 = pnand %p136, %p137
      %p139 = pneg %p138
      // Predicated region
      $region9: #{_lambda_.1} parent=5 // pred_check
        _
      $region10: #{_lambda_.1} parent=5 // pred_check_branch
        %141 = sbr.rel (%p138) target = $region12
      $region11: #{_lambda_.1} parent=5 // pred_region
        %s142 = ssub.s32 %s10, 1
        // Predicated region
        $region13: #{_lambda_.1} parent=11 // pred_check
          %p143 = pneg %p74
        $region14: #{_lambda_.1} parent=11 // pred_check_branch
          %145 = sbr.rel (%p143) target = $region16
        $region15: #{_lambda_.1} parent=11 // pred_region
          %147 = vsyncadd [#allocation3], 0
          %s148 = smul.addr %s20, 4
          %s149 = scalar_lea.hbm %s1, %s148
          %s150 = sshll.u32 %s149, 4
          %s151 = int_to_ptr.hbm [resolvable:$true] %s150
          %s152 = sshll.u32 [#allocation2], 4
          %s153 = int_to_ptr.vmem [resolvable:$true] %s152
          %158 = dma.hbm_to_vmem [thread:$0]  %s151, 9216, %s153, [#allocation3], 64, 64, 4
        $region16: #{_lambda_.1} parent=11 // pred_fallthru
          _
        // Predicated region
        $region17: #{_lambda_.1} parent=11 // pred_check
          %p159 = pneg %p100
        $region18: #{_lambda_.1} parent=11 // pred_check_branch
          %161 = sbr.rel (%p159) target = $region20
        $region19: #{_lambda_.1} parent=11 // pred_region
          %p162 = scmp.lt.s32.totalorder %s20, 0
          %s163 = scalar_select %p162, %s20, 0
          %s164 = scalar_lea.vmem %s2, %s163
        $region20: #{_lambda_.1} parent=11 // pred_fallthru
          _
      $region12: #{_lambda_.1} parent=5 // pred_fallthru
        _
      %p165 = scmp.lt.s32.totalorder %s10, 2
      // Predicated region
      $region21: #{_lambda_.1} parent=5 // pred_check
        %p166 = pneg %p165
      $region22: #{_lambda_.1} parent=5 // pred_check_branch
        %168 = sbr.rel (%p166) target = $region24
      $region23: #{_lambda_.1} parent=5 // pred_region
        // Predicated region
        $region25: #{_lambda_.1} parent=23 // pred_check
          %p169 = pneg %p42
        $region26: #{_lambda_.1} parent=23 // pred_check_branch
          %171 = sbr.rel (%p169) target = $region28
        $region27: #{_lambda_.1} parent=23 // pred_region
          %p172 = scmp.lt.s32.totalorder %s17, 1
          %s173 = scalar_select %p172, %s17, 1
          %s174 = smul.addr %s173, 14
          %s175 = smul.addr %s174, 4
          %s176 = scalar_lea.vmem %s0, %s175
        $region28: #{_lambda_.1} parent=23 // pred_fallthru
          _
      $region24: #{_lambda_.1} parent=5 // pred_fallthru
        _
      %p177 = scmp.le.s32.totalorder 1, %s10
      %p178 = scmp.lt.s32.totalorder %s10, 3
      %p179 = pnand %p177, %p178
      %p180 = pneg %p179
      // Predicated region
      $region29: #{_lambda_.1} parent=5 // pred_check
        _
      $region30: #{_lambda_.1} parent=5 // pred_check_branch
        %182 = sbr.rel (%p179) target = $region32
      $region31: #{_lambda_.1} parent=5 // pred_region
        %s183 = ssub.s32 %s10, 1
        // Predicated region
        $region33: #{_lambda_.1} parent=31 // pred_check
          %p184 = pneg %p74
        $region34: #{_lambda_.1} parent=31 // pred_check_branch
          %186 = sbr.rel (%p184) target = $region36
        $region35: #{_lambda_.1} parent=31 // pred_region
          %188 = dma.done [#allocation3], 9216
        $region36: #{_lambda_.1} parent=31 // pred_fallthru
          _
        %p189 = scmp.lt.s32.totalorder %s19, 1
        %s190 = scalar_select %p189, %s19, 1
        %s191 = smul.addr %s190, 14
        %s192 = smul.addr %s191, 4
        %s193 = scalar_lea.vmem %s0, %s192
        %p194 = pneg %p48
        %p195 = pneg %p45
        %p196 = pneg %p74
        %p197 = pneg %p71
        %p198 = scmp.lt.s32.totalorder %s20, 0
        %s199 = scalar_select %p198, %s20, 0
        %s200 = scalar_lea.vmem %s2, %s199
        %p201 = pneg %p100
        %p202 = pneg %p97
        %p203 = pneg %p128
        %p204 = pneg %p125
        %p205 = scmp.lt.s32.totalorder %s19, 1
        %s206 = scalar_select %p205, %s19, 1
        %p207 = scmp.lt.s32.totalorder %s20, 0
        %s208 = scalar_select %p207, %s20, 0
        %s209 = smul.addr %s206, 10
        %s210 = sadd.s32 %s208, %s209
        %s211 = smul.addr %s210, 4
        %s212 = scalar_lea.vmem %s3, %s211
        %p213 = scmp.lt.s32.totalorder %s19, 1
        %s214 = scalar_select %p213, %s19, 1
        %s215 = smul.addr %s214, 14
        %s216 = smul.addr %s215, 4
        %s217 = scalar_lea.vmem %s0, %s216
        %p218 = scmp.lt.s32.totalorder %s20, 0
        %s219 = scalar_select %p218, %s20, 0
        %s220 = scalar_lea.vmem %s2, %s219
        %p221 = scmp.lt.s32.totalorder %s19, 1
        %s222 = scalar_select %p221, %s19, 1
        %p223 = scmp.lt.s32.totalorder %s20, 0
        %s224 = scalar_select %p223, %s20, 0
        %s225 = smul.addr %s222, 10
        %s226 = sadd.s32 %s224, %s225
        %s227 = smul.addr %s226, 4
        %s228 = scalar_lea.vmem %s3, %s227
        %v229 = vld [vmem:[%s217] sm:$0xf]
        %v230 = vld [vmem:[%s217 + $0x4] sm:$0xf]
        %v231 = vld [vmem:[%s217 + $0x8] sm:$0xf]
        %v232 = vld [vmem:[%s217 + $0xc] sm:$0xf]
        %v233 = vld [vmem:[%s217 + $0x10] sm:$0xf]
        %v234 = vld [vmem:[%s217 + $0x14] sm:$0xf]
        %v235 = vld [vmem:[%s217 + $0x18] sm:$0xf]
        %v236 = vld [vmem:[%s217 + $0x1c] sm:$0xf]
        %v237 = vld [vmem:[%s217 + $0x20] sm:$0xf]
        %v238 = vld [vmem:[%s217 + $0x24] sm:$0xf]
        %v239 = vld [vmem:[#allocation2] sm:$0xf]
        %v240 = vld [vmem:[#allocation2 + $0x4] sm:$0xf]
        %v241 = vld [vmem:[#allocation2 + $0x8] sm:$0xf]
        %v242 = vld [vmem:[#allocation2 + $0xc] sm:$0xf]
        %v243 = vld [vmem:[#allocation2 + $0x10] sm:$0xf]
        %v244 = vld [vmem:[#allocation2 + $0x14] sm:$0xf]
        %v245 = vld [vmem:[#allocation2 + $0x18] sm:$0xf]
        %v246 = vld [vmem:[#allocation2 + $0x1c] sm:$0xf]
        %v247 = vld [vmem:[#allocation2 + $0x20] sm:$0xf]
        %v248 = vld [vmem:[#allocation2 + $0x24] sm:$0xf]
        %v249 = vld [vmem:[#allocation2 + $0x28] sm:$0xf]
        %v250 = vld [vmem:[#allocation2 + $0x2c] sm:$0xf]
        %v251 = vld [vmem:[#allocation2 + $0x30] sm:$0xf]
        %v252 = vld [vmem:[#allocation2 + $0x34] sm:$0xf]
        %v253 = vld [vmem:[#allocation2 + $0x38] sm:$0xf]
        %v254 = vld [vmem:[#allocation2 + $0x3c] sm:$0xf]
        %v255 = vld [vmem:[%s217 + $0x28] sm:$0x1]
        %s256 = scalar_lea.vmem [#allocation2], 64
        %v257 = vld [vmem:[%s256] sm:$0xf]
        %v258 = vld [vmem:[%s256 + $0x4] sm:$0xf]
        %v259 = vld [vmem:[%s256 + $0x8] sm:$0xf]
        %v260 = vld [vmem:[%s256 + $0xc] sm:$0xf]
        %v261 = vld [vmem:[%s256 + $0x10] sm:$0xf]
        %v262 = vld [vmem:[%s256 + $0x14] sm:$0xf]
        %v263 = vld [vmem:[%s256 + $0x18] sm:$0xf]
        %v264 = vld [vmem:[%s256 + $0x1c] sm:$0xf]
        %v265 = vld [vmem:[%s256 + $0x20] sm:$0xf]
        %v266 = vld [vmem:[%s256 + $0x24] sm:$0xf]
        %v267 = vld [vmem:[%s256 + $0x28] sm:$0xf]
        %v268 = vld [vmem:[%s256 + $0x2c] sm:$0xf]
        %v269 = vld [vmem:[%s256 + $0x30] sm:$0xf]
        %v270 = vld [vmem:[%s256 + $0x34] sm:$0xf]
        %v271 = vld [vmem:[%s256 + $0x38] sm:$0xf]
        %v272 = vld [vmem:[%s256 + $0x3c] sm:$0xf]
        %v284 = vunpack.c.l.b16 %v229
        %v285 = vunpack.c.l.b16 %v230
        %v286 = vunpack.c.l.b16 %v231
        %v287 = vunpack.c.l.b16 %v232
        %v288 = vunpack.c.l.b16 %v233
        %v289 = vunpack.c.l.b16 %v234
        %v290 = vunpack.c.l.b16 %v235
        %v291 = vunpack.c.l.b16 %v236
        %v292 = vunpack.c.l.b16 %v237
        %v293 = vunpack.c.l.b16 %v238
        %v294 = vunpack.c.l.b16 %v255
        %v295 = vpack.c.b16 %v285, %v284
        %v296 = vpack.c.b16 %v287, %v286
        %v297 = vpack.c.b16 %v289, %v288
        %v298 = vpack.c.b16 %v291, %v290
        %v299 = vpack.c.b16 %v293, %v292
        %v300 = vpack.c.b16 %v294, %v294
        %vm301 = vsmask.f32 7424
        %v303 = vshrl.u32 %v295, 16
        %v305 = vshll.u32 %v295, 16
        %v307 = vrot.slane %v305, 1
        %v308 = vor.u32 %v303, %v307
        %v310 = vshll.u32 %v296, 16
        %v312 = vrot.slane %v310, 1
        %v313 = vsel %vm301, %v308, %v312
        %v314 = vshrl.u32 %v296, 16
        %v316 = vor.u32 %v314, %v312
        %v318 = vshll.u32 %v297, 16
        %v320 = vrot.slane %v318, 1
        %v321 = vsel %vm301, %v316, %v320
        %v322 = vshrl.u32 %v297, 16
        %v324 = vor.u32 %v322, %v320
        %v326 = vshll.u32 %v298, 16
        %v328 = vrot.slane %v326, 1
        %v329 = vsel %vm301, %v324, %v328
        %v330 = vshrl.u32 %v298, 16
        %v332 = vor.u32 %v330, %v328
        %v334 = vshll.u32 %v299, 16
        %v336 = vrot.slane %v334, 1
        %v337 = vsel %vm301, %v332, %v336
        %v338 = vshrl.u32 %v299, 16
        %v340 = vor.u32 %v338, %v336
        %v342 = vshll.u32 %v300, 16
        %v344 = vrot.slane %v342, 1
        %v345 = vsel %vm301, %v340, %v344
        %v367 = vunpack.c.l.b16 %v257
        %v368 = vunpack.c.l.b16 %v258
        %v369 = vunpack.c.l.b16 %v259
        %v370 = vunpack.c.l.b16 %v260
        %v371 = vunpack.c.l.b16 %v261
        %v372 = vunpack.c.l.b16 %v262
        %v373 = vunpack.c.l.b16 %v263
        %v374 = vunpack.c.l.b16 %v264
        %v375 = vunpack.c.l.b16 %v265
        %v376 = vunpack.c.l.b16 %v266
        %v377 = vunpack.c.l.b16 %v267
        %v378 = vunpack.c.l.b16 %v268
        %v379 = vunpack.c.l.b16 %v269
        %v380 = vunpack.c.l.b16 %v270
        %v381 = vunpack.c.l.b16 %v271
        %v382 = vunpack.c.l.b16 %v272
        %v383 = vpack.c.b16 %v368, %v367
        %v384 = vpack.c.b16 %v370, %v369
        %v385 = vpack.c.b16 %v372, %v371
        %v386 = vpack.c.b16 %v374, %v373
        %v387 = vpack.c.b16 %v376, %v375
        %v388 = vpack.c.b16 %v378, %v377
        %v389 = vpack.c.b16 %v380, %v379
        %v390 = vpack.c.b16 %v382, %v381
        %399 = vmatpush.bf16.msra.mxu0 %v390
        %400 = vmatpush.bf16.msra.mxu0 %v389
        %401 = vmatpush.bf16.msra.mxu0 %v388
        %402 = vmatpush.bf16.msra.mxu0 %v387
        %403 = vmatpush.bf16.msra.mxu0 %v386
        %404 = vmatpush.bf16.msra.mxu0 %v385
        %405 = vmatpush.bf16.msra.mxu0 %v384
        %406 = vmatpush.bf16.msra.mxu0 %v383
        %407 = vmatmul.bf16.gmra.mxu0 %v313
        %v408 = vpop.f32.mrf.mxu0
        %v409 = vadd.f32 0.0, %v408
        %v410 = vpop.f32.mrf.mxu0
        %v411 = vadd.f32 0.0, %v410
        %412 = vmatmul.bf16.gmra.mxu0 %v321
        %v413 = vpop.f32.mrf.mxu0
        %v414 = vadd.f32 0.0, %v413
        %v415 = vpop.f32.mrf.mxu0
        %v416 = vadd.f32 0.0, %v415
        %417 = vmatmul.bf16.gmra.mxu0 %v329
        %v418 = vpop.f32.mrf.mxu0
        %v419 = vadd.f32 0.0, %v418
        %v420 = vpop.f32.mrf.mxu0
        %v421 = vadd.f32 0.0, %v420
        %422 = vmatmul.bf16.gmra.mxu0 %v337
        %v423 = vpop.f32.mrf.mxu0
        %v424 = vadd.f32 0.0, %v423
        %v425 = vpop.f32.mrf.mxu0
        %v426 = vadd.f32 0.0, %v425
        %427 = vmatmul.bf16.gmra.mxu0 %v345
        %v428 = vpop.f32.mrf.mxu0
        %v429 = vadd.f32 0.0, %v428
        %v430 = vpop.f32.mrf.mxu0
        %v431 = vadd.f32 0.0, %v430
        %432 = vdwg.mxu0
        %v454 = vunpack.c.l.b16 %v239
        %v455 = vunpack.c.l.b16 %v240
        %v456 = vunpack.c.l.b16 %v241
        %v457 = vunpack.c.l.b16 %v242
        %v458 = vunpack.c.l.b16 %v243
        %v459 = vunpack.c.l.b16 %v244
        %v460 = vunpack.c.l.b16 %v245
        %v461 = vunpack.c.l.b16 %v246
        %v462 = vunpack.c.l.b16 %v247
        %v463 = vunpack.c.l.b16 %v248
        %v464 = vunpack.c.l.b16 %v249
        %v465 = vunpack.c.l.b16 %v250
        %v466 = vunpack.c.l.b16 %v251
        %v467 = vunpack.c.l.b16 %v252
        %v468 = vunpack.c.l.b16 %v253
        %v469 = vunpack.c.l.b16 %v254
        %v470 = vpack.c.b16 %v455, %v454
        %v471 = vpack.c.b16 %v457, %v456
        %v472 = vpack.c.b16 %v459, %v458
        %v473 = vpack.c.b16 %v461, %v460
        %v474 = vpack.c.b16 %v463, %v462
        %v475 = vpack.c.b16 %v465, %v464
        %v476 = vpack.c.b16 %v467, %v466
        %v477 = vpack.c.b16 %v469, %v468
        %486 = vmatpush.bf16.msra.mxu0 %v477
        %487 = vmatpush.bf16.msra.mxu0 %v476
        %488 = vmatpush.bf16.msra.mxu0 %v475
        %489 = vmatpush.bf16.msra.mxu0 %v474
        %490 = vmatpush.bf16.msra.mxu0 %v473
        %491 = vmatpush.bf16.msra.mxu0 %v472
        %492 = vmatpush.bf16.msra.mxu0 %v471
        %493 = vmatpush.bf16.msra.mxu0 %v470
        %494 = vmatmul.bf16.gmra.mxu0 %v295
        %v495 = vpop.f32.mrf.mxu0
        %v496 = vadd.f32 %v409, %v495
        %v497 = vpop.f32.mrf.mxu0
        %v498 = vadd.f32 %v411, %v497
        %499 = vmatmul.bf16.gmra.mxu0 %v296
        %v500 = vpop.f32.mrf.mxu0
        %v501 = vadd.f32 %v414, %v500
        %v502 = vpop.f32.mrf.mxu0
        %v503 = vadd.f32 %v416, %v502
        %504 = vmatmul.bf16.gmra.mxu0 %v297
        %v505 = vpop.f32.mrf.mxu0
        %v506 = vadd.f32 %v419, %v505
        %v507 = vpop.f32.mrf.mxu0
        %v508 = vadd.f32 %v421, %v507
        %509 = vmatmul.bf16.gmra.mxu0 %v298
        %v510 = vpop.f32.mrf.mxu0
        %v511 = vadd.f32 %v424, %v510
        %v512 = vpop.f32.mrf.mxu0
        %v513 = vadd.f32 %v426, %v512
        %514 = vmatmul.bf16.gmra.mxu0 %v299
        %v515 = vpop.f32.mrf.mxu0
        %v516 = vadd.f32 %v429, %v515
        %v517 = vpop.f32.mrf.mxu0
        %v518 = vadd.f32 %v431, %v517
        %519 = vdwg.mxu0
        %v520 = vld [vmem:[%s217] sm:$0xe]
        %s521 = scalar_lea.vmem [#allocation2], 128
        %v522 = vld [vmem:[%s521] sm:$0xf]
        %v523 = vld [vmem:[%s521 + $0x4] sm:$0xf]
        %v524 = vld [vmem:[%s521 + $0x8] sm:$0xf]
        %v525 = vld [vmem:[%s521 + $0xc] sm:$0xf]
        %v526 = vld [vmem:[%s521 + $0x10] sm:$0xf]
        %v527 = vld [vmem:[%s521 + $0x14] sm:$0xf]
        %v528 = vld [vmem:[%s521 + $0x18] sm:$0xf]
        %v529 = vld [vmem:[%s521 + $0x1c] sm:$0xf]
        %v530 = vld [vmem:[%s521 + $0x20] sm:$0xf]
        %v531 = vld [vmem:[%s521 + $0x24] sm:$0xf]
        %v532 = vld [vmem:[%s521 + $0x28] sm:$0xf]
        %v533 = vld [vmem:[%s521 + $0x2c] sm:$0xf]
        %v534 = vld [vmem:[%s521 + $0x30] sm:$0xf]
        %v535 = vld [vmem:[%s521 + $0x34] sm:$0xf]
        %v536 = vld [vmem:[%s521 + $0x38] sm:$0xf]
        %v537 = vld [vmem:[%s521 + $0x3c] sm:$0xf]
        %v539 = vunpack.c.l.b16 %v520
        %v540 = vpack.c.b16 %v285, %v539
        %vm541 = vcmask 1046528
        %v542 = vrot.slane %v540, 1
        %v543 = vrot.slane %v296, 1
        %v544 = vsel %vm541, %v542, %v543
        %v545 = vrot.slane %v297, 1
        %v546 = vsel %vm541, %v543, %v545
        %v547 = vrot.slane %v298, 1
        %v548 = vsel %vm541, %v545, %v547
        %v549 = vrot.slane %v299, 1
        %v550 = vsel %vm541, %v547, %v549
        %v551 = vrot.slane %v300, 1
        %v552 = vsel %vm541, %v549, %v551
        %v574 = vunpack.c.l.b16 %v522
        %v575 = vunpack.c.l.b16 %v523
        %v576 = vunpack.c.l.b16 %v524
        %v577 = vunpack.c.l.b16 %v525
        %v578 = vunpack.c.l.b16 %v526
        %v579 = vunpack.c.l.b16 %v527
        %v580 = vunpack.c.l.b16 %v528
        %v581 = vunpack.c.l.b16 %v529
        %v582 = vunpack.c.l.b16 %v530
        %v583 = vunpack.c.l.b16 %v531
        %v584 = vunpack.c.l.b16 %v532
        %v585 = vunpack.c.l.b16 %v533
        %v586 = vunpack.c.l.b16 %v534
        %v587 = vunpack.c.l.b16 %v535
        %v588 = vunpack.c.l.b16 %v536
        %v589 = vunpack.c.l.b16 %v537
        %v590 = vpack.c.b16 %v575, %v574
        %v591 = vpack.c.b16 %v577, %v576
        %v592 = vpack.c.b16 %v579, %v578
        %v593 = vpack.c.b16 %v581, %v580
        %v594 = vpack.c.b16 %v583, %v582
        %v595 = vpack.c.b16 %v585, %v584
        %v596 = vpack.c.b16 %v587, %v586
        %v597 = vpack.c.b16 %v589, %v588
        %606 = vmatpush.bf16.msra.mxu0 %v597
        %607 = vmatpush.bf16.msra.mxu0 %v596
        %608 = vmatpush.bf16.msra.mxu0 %v595
        %609 = vmatpush.bf16.msra.mxu0 %v594
        %610 = vmatpush.bf16.msra.mxu0 %v593
        %611 = vmatpush.bf16.msra.mxu0 %v592
        %612 = vmatpush.bf16.msra.mxu0 %v591
        %613 = vmatpush.bf16.msra.mxu0 %v590
        %614 = vmatmul.bf16.gmra.mxu0 %v544
        %v615 = vpop.f32.mrf.mxu0
        %v616 = vadd.f32 0.0, %v615
        %v617 = vpop.f32.mrf.mxu0
        %v618 = vadd.f32 0.0, %v617
        %619 = vmatmul.bf16.gmra.mxu0 %v546
        %v620 = vpop.f32.mrf.mxu0
        %v621 = vadd.f32 0.0, %v620
        %v622 = vpop.f32.mrf.mxu0
        %v623 = vadd.f32 0.0, %v622
        %624 = vmatmul.bf16.gmra.mxu0 %v548
        %v625 = vpop.f32.mrf.mxu0
        %v626 = vadd.f32 0.0, %v625
        %v627 = vpop.f32.mrf.mxu0
        %v628 = vadd.f32 0.0, %v627
        %629 = vmatmul.bf16.gmra.mxu0 %v550
        %v630 = vpop.f32.mrf.mxu0
        %v631 = vadd.f32 0.0, %v630
        %v632 = vpop.f32.mrf.mxu0
        %v633 = vadd.f32 0.0, %v632
        %634 = vmatmul.bf16.gmra.mxu0 %v552
        %v635 = vpop.f32.mrf.mxu0
        %v636 = vadd.f32 0.0, %v635
        %v637 = vpop.f32.mrf.mxu0
        %v638 = vadd.f32 0.0, %v637
        %639 = vdwg.mxu0
        %v640 = vadd.f32 %v496, %v616
        %v641 = vadd.f32 %v498, %v618
        %v642 = vadd.f32 %v501, %v621
        %v643 = vadd.f32 %v503, %v623
        %v644 = vadd.f32 %v506, %v626
        %v645 = vadd.f32 %v508, %v628
        %v646 = vadd.f32 %v511, %v631
        %v647 = vadd.f32 %v513, %v633
        %v648 = vadd.f32 %v516, %v636
        %v649 = vadd.f32 %v518, %v638
        %v650 = vld [vmem:[%s217 + $0x4] sm:$0xe]
        %v651 = vld [vmem:[%s217 + $0x8] sm:$0xf]
        %v652 = vld [vmem:[%s217 + $0xc] sm:$0xf]
        %v653 = vld [vmem:[%s217 + $0x10] sm:$0xf]
        %v654 = vld [vmem:[%s217 + $0x14] sm:$0xf]
        %v655 = vld [vmem:[%s217 + $0x18] sm:$0xf]
        %v656 = vld [vmem:[%s217 + $0x1c] sm:$0xf]
        %v657 = vld [vmem:[%s217 + $0x20] sm:$0xf]
        %v658 = vld [vmem:[%s217 + $0x24] sm:$0xf]
        %v659 = vld [vmem:[%s217 + $0x28] sm:$0xf]
        %v660 = vld [vmem:[%s217 + $0x2c] sm:$0x1]
        %s661 = scalar_lea.vmem [#allocation2], 192
        %v662 = vld [vmem:[%s661] sm:$0xf]
        %v663 = vld [vmem:[%s661 + $0x4] sm:$0xf]
        %v664 = vld [vmem:[%s661 + $0x8] sm:$0xf]
        %v665 = vld [vmem:[%s661 + $0xc] sm:$0xf]
        %v666 = vld [vmem:[%s661 + $0x10] sm:$0xf]
        %v667 = vld [vmem:[%s661 + $0x14] sm:$0xf]
        %v668 = vld [vmem:[%s661 + $0x18] sm:$0xf]
        %v669 = vld [vmem:[%s661 + $0x1c] sm:$0xf]
        %v670 = vld [vmem:[%s661 + $0x20] sm:$0xf]
        %v671 = vld [vmem:[%s661 + $0x24] sm:$0xf]
        %v672 = vld [vmem:[%s661 + $0x28] sm:$0xf]
        %v673 = vld [vmem:[%s661 + $0x2c] sm:$0xf]
        %v674 = vld [vmem:[%s661 + $0x30] sm:$0xf]
        %v675 = vld [vmem:[%s661 + $0x34] sm:$0xf]
        %v676 = vld [vmem:[%s661 + $0x38] sm:$0xf]
        %v677 = vld [vmem:[%s661 + $0x3c] sm:$0xf]
        %v689 = vunpack.c.l.b16 %v650
        %v690 = vunpack.c.l.b16 %v651
        %v691 = vunpack.c.l.b16 %v652
        %v692 = vunpack.c.l.b16 %v653
        %v693 = vunpack.c.l.b16 %v654
        %v694 = vunpack.c.l.b16 %v655
        %v695 = vunpack.c.l.b16 %v656
        %v696 = vunpack.c.l.b16 %v657
        %v697 = vunpack.c.l.b16 %v658
        %v698 = vunpack.c.l.b16 %v659
        %v699 = vunpack.c.l.b16 %v660
        %v700 = vpack.c.b16 %v690, %v689
        %v701 = vpack.c.b16 %v692, %v691
        %v702 = vpack.c.b16 %v694, %v693
        %v703 = vpack.c.b16 %v696, %v695
        %v704 = vpack.c.b16 %v698, %v697
        %v705 = vpack.c.b16 %v699, %v699
        %v706 = vrot.slane %v700, 1
        %v707 = vrot.slane %v701, 1
        %v708 = vsel %vm541, %v706, %v707
        %v709 = vrot.slane %v702, 1
        %v710 = vsel %vm541, %v707, %v709
        %v711 = vrot.slane %v703, 1
        %v712 = vsel %vm541, %v709, %v711
        %v713 = vrot.slane %v704, 1
        %v714 = vsel %vm541, %v711, %v713
        %v715 = vrot.slane %v705, 1
        %v716 = vsel %vm541, %v713, %v715
        %v738 = vunpack.c.l.b16 %v662
        %v739 = vunpack.c.l.b16 %v663
        %v740 = vunpack.c.l.b16 %v664
        %v741 = vunpack.c.l.b16 %v665
        %v742 = vunpack.c.l.b16 %v666
        %v743 = vunpack.c.l.b16 %v667
        %v744 = vunpack.c.l.b16 %v668
        %v745 = vunpack.c.l.b16 %v669
        %v746 = vunpack.c.l.b16 %v670
        %v747 = vunpack.c.l.b16 %v671
        %v748 = vunpack.c.l.b16 %v672
        %v749 = vunpack.c.l.b16 %v673
        %v750 = vunpack.c.l.b16 %v674
        %v751 = vunpack.c.l.b16 %v675
        %v752 = vunpack.c.l.b16 %v676
        %v753 = vunpack.c.l.b16 %v677
        %v754 = vpack.c.b16 %v739, %v738
        %v755 = vpack.c.b16 %v741, %v740
        %v756 = vpack.c.b16 %v743, %v742
        %v757 = vpack.c.b16 %v745, %v744
        %v758 = vpack.c.b16 %v747, %v746
        %v759 = vpack.c.b16 %v749, %v748
        %v760 = vpack.c.b16 %v751, %v750
        %v761 = vpack.c.b16 %v753, %v752
        %770 = vmatpush.bf16.msra.mxu0 %v761
        %771 = vmatpush.bf16.msra.mxu0 %v760
        %772 = vmatpush.bf16.msra.mxu0 %v759
        %773 = vmatpush.bf16.msra.mxu0 %v758
        %774 = vmatpush.bf16.msra.mxu0 %v757
        %775 = vmatpush.bf16.msra.mxu0 %v756
        %776 = vmatpush.bf16.msra.mxu0 %v755
        %777 = vmatpush.bf16.msra.mxu0 %v754
        %778 = vmatmul.bf16.gmra.mxu0 %v708
        %v779 = vpop.f32.mrf.mxu0
        %v780 = vadd.f32 0.0, %v779
        %v781 = vpop.f32.mrf.mxu0
        %v782 = vadd.f32 0.0, %v781
        %783 = vmatmul.bf16.gmra.mxu0 %v710
        %v784 = vpop.f32.mrf.mxu0
        %v785 = vadd.f32 0.0, %v784
        %v786 = vpop.f32.mrf.mxu0
        %v787 = vadd.f32 0.0, %v786
        %788 = vmatmul.bf16.gmra.mxu0 %v712
        %v789 = vpop.f32.mrf.mxu0
        %v790 = vadd.f32 0.0, %v789
        %v791 = vpop.f32.mrf.mxu0
        %v792 = vadd.f32 0.0, %v791
        %793 = vmatmul.bf16.gmra.mxu0 %v714
        %v794 = vpop.f32.mrf.mxu0
        %v795 = vadd.f32 0.0, %v794
        %v796 = vpop.f32.mrf.mxu0
        %v797 = vadd.f32 0.0, %v796
        %798 = vmatmul.bf16.gmra.mxu0 %v716
        %v799 = vpop.f32.mrf.mxu0
        %v800 = vadd.f32 0.0, %v799
        %v801 = vpop.f32.mrf.mxu0
        %v802 = vadd.f32 0.0, %v801
        %803 = vdwg.mxu0
        %v804 = vadd.f32 %v640, %v780
        %v805 = vadd.f32 %v641, %v782
        %v806 = vadd.f32 %v642, %v785
        %v807 = vadd.f32 %v643, %v787
        %v808 = vadd.f32 %v644, %v790
        %v809 = vadd.f32 %v645, %v792
        %v810 = vadd.f32 %v646, %v795
        %v811 = vadd.f32 %v647, %v797
        %v812 = vadd.f32 %v648, %v800
        %v813 = vadd.f32 %v649, %v802
        %v814 = vld [vmem:[%s217 + $0x2c] sm:$0x3]
        %s815 = scalar_lea.vmem [#allocation2], 256
        %v816 = vld [vmem:[%s815] sm:$0xf]
        %v817 = vld [vmem:[%s815 + $0x4] sm:$0xf]
        %v818 = vld [vmem:[%s815 + $0x8] sm:$0xf]
        %v819 = vld [vmem:[%s815 + $0xc] sm:$0xf]
        %v820 = vld [vmem:[%s815 + $0x10] sm:$0xf]
        %v821 = vld [vmem:[%s815 + $0x14] sm:$0xf]
        %v822 = vld [vmem:[%s815 + $0x18] sm:$0xf]
        %v823 = vld [vmem:[%s815 + $0x1c] sm:$0xf]
        %v824 = vld [vmem:[%s815 + $0x20] sm:$0xf]
        %v825 = vld [vmem:[%s815 + $0x24] sm:$0xf]
        %v826 = vld [vmem:[%s815 + $0x28] sm:$0xf]
        %v827 = vld [vmem:[%s815 + $0x2c] sm:$0xf]
        %v828 = vld [vmem:[%s815 + $0x30] sm:$0xf]
        %v829 = vld [vmem:[%s815 + $0x34] sm:$0xf]
        %v830 = vld [vmem:[%s815 + $0x38] sm:$0xf]
        %v831 = vld [vmem:[%s815 + $0x3c] sm:$0xf]
        %v833 = vunpack.c.l.b16 %v814
        %v834 = vpack.c.b16 %v833, %v833
        %vm835 = vsmask.f32 6400
        %v837 = vshrl.u32 %v700, 16
        %v839 = vrot.slane %v837, 1
        %v840 = vshll.u32 %v700, 16
        %v842 = vrot.slane %v840, 2
        %v843 = vor.u32 %v839, %v842
        %v845 = vshrl.u32 %v701, 16
        %v847 = vrot.slane %v845, 1
        %v848 = vshll.u32 %v701, 16
        %v850 = vrot.slane %v848, 2
        %v851 = vor.u32 %v847, %v850
        %v852 = vsel %vm835, %v843, %v851
        %v854 = vshrl.u32 %v702, 16
        %v856 = vrot.slane %v854, 1
        %v857 = vshll.u32 %v702, 16
        %v859 = vrot.slane %v857, 2
        %v860 = vor.u32 %v856, %v859
        %v861 = vsel %vm835, %v851, %v860
        %v863 = vshrl.u32 %v703, 16
        %v865 = vrot.slane %v863, 1
        %v866 = vshll.u32 %v703, 16
        %v868 = vrot.slane %v866, 2
        %v869 = vor.u32 %v865, %v868
        %v870 = vsel %vm835, %v860, %v869
        %v872 = vshrl.u32 %v704, 16
        %v874 = vrot.slane %v872, 1
        %v875 = vshll.u32 %v704, 16
        %v877 = vrot.slane %v875, 2
        %v878 = vor.u32 %v874, %v877
        %v879 = vsel %vm835, %v869, %v878
        %v881 = vshrl.u32 %v834, 16
        %v883 = vrot.slane %v881, 1
        %v884 = vshll.u32 %v834, 16
        %v886 = vrot.slane %v884, 2
        %v887 = vor.u32 %v883, %v886
        %v888 = vsel %vm835, %v878, %v887
        %v910 = vunpack.c.l.b16 %v816
        %v911 = vunpack.c.l.b16 %v817
        %v912 = vunpack.c.l.b16 %v818
        %v913 = vunpack.c.l.b16 %v819
        %v914 = vunpack.c.l.b16 %v820
        %v915 = vunpack.c.l.b16 %v821
        %v916 = vunpack.c.l.b16 %v822
        %v917 = vunpack.c.l.b16 %v823
        %v918 = vunpack.c.l.b16 %v824
        %v919 = vunpack.c.l.b16 %v825
        %v920 = vunpack.c.l.b16 %v826
        %v921 = vunpack.c.l.b16 %v827
        %v922 = vunpack.c.l.b16 %v828
        %v923 = vunpack.c.l.b16 %v829
        %v924 = vunpack.c.l.b16 %v830
        %v925 = vunpack.c.l.b16 %v831
        %v926 = vpack.c.b16 %v911, %v910
        %v927 = vpack.c.b16 %v913, %v912
        %v928 = vpack.c.b16 %v915, %v914
        %v929 = vpack.c.b16 %v917, %v916
        %v930 = vpack.c.b16 %v919, %v918
        %v931 = vpack.c.b16 %v921, %v920
        %v932 = vpack.c.b16 %v923, %v922
        %v933 = vpack.c.b16 %v925, %v924
        %942 = vmatpush.bf16.msra.mxu0 %v933
        %943 = vmatpush.bf16.msra.mxu0 %v932
        %944 = vmatpush.bf16.msra.mxu0 %v931
        %945 = vmatpush.bf16.msra.mxu0 %v930
        %946 = vmatpush.bf16.msra.mxu0 %v929
        %947 = vmatpush.bf16.msra.mxu0 %v928
        %948 = vmatpush.bf16.msra.mxu0 %v927
        %949 = vmatpush.bf16.msra.mxu0 %v926
        %950 = vmatmul.bf16.gmra.mxu0 %v852
        %v951 = vpop.f32.mrf.mxu0
        %v952 = vadd.f32 0.0, %v951
        %v953 = vpop.f32.mrf.mxu0
        %v954 = vadd.f32 0.0, %v953
        %955 = vmatmul.bf16.gmra.mxu0 %v861
        %v956 = vpop.f32.mrf.mxu0
        %v957 = vadd.f32 0.0, %v956
        %v958 = vpop.f32.mrf.mxu0
        %v959 = vadd.f32 0.0, %v958
        %960 = vmatmul.bf16.gmra.mxu0 %v870
        %v961 = vpop.f32.mrf.mxu0
        %v962 = vadd.f32 0.0, %v961
        %v963 = vpop.f32.mrf.mxu0
        %v964 = vadd.f32 0.0, %v963
        %965 = vmatmul.bf16.gmra.mxu0 %v879
        %v966 = vpop.f32.mrf.mxu0
        %v967 = vadd.f32 0.0, %v966
        %v968 = vpop.f32.mrf.mxu0
        %v969 = vadd.f32 0.0, %v968
        %970 = vmatmul.bf16.gmra.mxu0 %v888
        %v971 = vpop.f32.mrf.mxu0
        %v972 = vadd.f32 0.0, %v971
        %v973 = vpop.f32.mrf.mxu0
        %v974 = vadd.f32 0.0, %v973
        %975 = vdwg.mxu0
        %v976 = vadd.f32 %v804, %v952
        %v977 = vadd.f32 %v805, %v954
        %v978 = vadd.f32 %v806, %v957
        %v979 = vadd.f32 %v807, %v959
        %v980 = vadd.f32 %v808, %v962
        %v981 = vadd.f32 %v809, %v964
        %v982 = vadd.f32 %v810, %v967
        %v983 = vadd.f32 %v811, %v969
        %v984 = vadd.f32 %v812, %v972
        %v985 = vadd.f32 %v813, %v974
        %v986 = vld [vmem:[%s217 + $0x4] sm:$0xc]
        %s987 = scalar_lea.vmem [#allocation2], 320
        %v988 = vld [vmem:[%s987] sm:$0xf]
        %v989 = vld [vmem:[%s987 + $0x4] sm:$0xf]
        %v990 = vld [vmem:[%s987 + $0x8] sm:$0xf]
        %v991 = vld [vmem:[%s987 + $0xc] sm:$0xf]
        %v992 = vld [vmem:[%s987 + $0x10] sm:$0xf]
        %v993 = vld [vmem:[%s987 + $0x14] sm:$0xf]
        %v994 = vld [vmem:[%s987 + $0x18] sm:$0xf]
        %v995 = vld [vmem:[%s987 + $0x1c] sm:$0xf]
        %v996 = vld [vmem:[%s987 + $0x20] sm:$0xf]
        %v997 = vld [vmem:[%s987 + $0x24] sm:$0xf]
        %v998 = vld [vmem:[%s987 + $0x28] sm:$0xf]
        %v999 = vld [vmem:[%s987 + $0x2c] sm:$0xf]
        %v1000 = vld [vmem:[%s987 + $0x30] sm:$0xf]
        %v1001 = vld [vmem:[%s987 + $0x34] sm:$0xf]
        %v1002 = vld [vmem:[%s987 + $0x38] sm:$0xf]
        %v1003 = vld [vmem:[%s987 + $0x3c] sm:$0xf]
        %v1005 = vunpack.c.l.b16 %v986
        %v1006 = vpack.c.b16 %v690, %v1005
        %vm1007 = vcmask 1045504
        %v1008 = vrot.slane %v1006, 2
        %v1009 = vrot.slane %v701, 2
        %v1010 = vsel %vm1007, %v1008, %v1009
        %v1011 = vrot.slane %v702, 2
        %v1012 = vsel %vm1007, %v1009, %v1011
        %v1013 = vrot.slane %v703, 2
        %v1014 = vsel %vm1007, %v1011, %v1013
        %v1015 = vrot.slane %v704, 2
        %v1016 = vsel %vm1007, %v1013, %v1015
        %v1017 = vrot.slane %v834, 2
        %v1018 = vsel %vm1007, %v1015, %v1017
        %v1040 = vunpack.c.l.b16 %v988
        %v1041 = vunpack.c.l.b16 %v989
        %v1042 = vunpack.c.l.b16 %v990
        %v1043 = vunpack.c.l.b16 %v991
        %v1044 = vunpack.c.l.b16 %v992
        %v1045 = vunpack.c.l.b16 %v993
        %v1046 = vunpack.c.l.b16 %v994
        %v1047 = vunpack.c.l.b16 %v995
        %v1048 = vunpack.c.l.b16 %v996
        %v1049 = vunpack.c.l.b16 %v997
        %v1050 = vunpack.c.l.b16 %v998
        %v1051 = vunpack.c.l.b16 %v999
        %v1052 = vunpack.c.l.b16 %v1000
        %v1053 = vunpack.c.l.b16 %v1001
        %v1054 = vunpack.c.l.b16 %v1002
        %v1055 = vunpack.c.l.b16 %v1003
        %v1056 = vpack.c.b16 %v1041, %v1040
        %v1057 = vpack.c.b16 %v1043, %v1042
        %v1058 = vpack.c.b16 %v1045, %v1044
        %v1059 = vpack.c.b16 %v1047, %v1046
        %v1060 = vpack.c.b16 %v1049, %v1048
        %v1061 = vpack.c.b16 %v1051, %v1050
        %v1062 = vpack.c.b16 %v1053, %v1052
        %v1063 = vpack.c.b16 %v1055, %v1054
        %1072 = vmatpush.bf16.msra.mxu0 %v1063
        %1073 = vmatpush.bf16.msra.mxu0 %v1062
        %1074 = vmatpush.bf16.msra.mxu0 %v1061
        %1075 = vmatpush.bf16.msra.mxu0 %v1060
        %1076 = vmatpush.bf16.msra.mxu0 %v1059
        %1077 = vmatpush.bf16.msra.mxu0 %v1058
        %1078 = vmatpush.bf16.msra.mxu0 %v1057
        %1079 = vmatpush.bf16.msra.mxu0 %v1056
        %1080 = vmatmul.bf16.gmra.mxu0 %v1010
        %v1081 = vpop.f32.mrf.mxu0
        %v1082 = vadd.f32 0.0, %v1081
        %v1083 = vpop.f32.mrf.mxu0
        %v1084 = vadd.f32 0.0, %v1083
        %1085 = vmatmul.bf16.gmra.mxu0 %v1012
        %v1086 = vpop.f32.mrf.mxu0
        %v1087 = vadd.f32 0.0, %v1086
        %v1088 = vpop.f32.mrf.mxu0
        %v1089 = vadd.f32 0.0, %v1088
        %1090 = vmatmul.bf16.gmra.mxu0 %v1014
        %v1091 = vpop.f32.mrf.mxu0
        %v1092 = vadd.f32 0.0, %v1091
        %v1093 = vpop.f32.mrf.mxu0
        %v1094 = vadd.f32 0.0, %v1093
        %1095 = vmatmul.bf16.gmra.mxu0 %v1016
        %v1096 = vpop.f32.mrf.mxu0
        %v1097 = vadd.f32 0.0, %v1096
        %v1098 = vpop.f32.mrf.mxu0
        %v1099 = vadd.f32 0.0, %v1098
        %1100 = vmatmul.bf16.gmra.mxu0 %v1018
        %v1101 = vpop.f32.mrf.mxu0
        %v1102 = vadd.f32 0.0, %v1101
        %v1103 = vpop.f32.mrf.mxu0
        %v1104 = vadd.f32 0.0, %v1103
        %1105 = vdwg.mxu0
        %v1106 = vadd.f32 %v976, %v1082
        %v1107 = vadd.f32 %v977, %v1084
        %v1108 = vadd.f32 %v978, %v1087
        %v1109 = vadd.f32 %v979, %v1089
        %v1110 = vadd.f32 %v980, %v1092
        %v1111 = vadd.f32 %v981, %v1094
        %v1112 = vadd.f32 %v982, %v1097
        %v1113 = vadd.f32 %v983, %v1099
        %v1114 = vadd.f32 %v984, %v1102
        %v1115 = vadd.f32 %v985, %v1104
        %v1116 = vld [vmem:[%s217 + $0x8] sm:$0xc]
        %v1117 = vld [vmem:[%s217 + $0xc] sm:$0xf]
        %v1118 = vld [vmem:[%s217 + $0x10] sm:$0xf]
        %v1119 = vld [vmem:[%s217 + $0x14] sm:$0xf]
        %v1120 = vld [vmem:[%s217 + $0x18] sm:$0xf]
        %v1121 = vld [vmem:[%s217 + $0x1c] sm:$0xf]
        %v1122 = vld [vmem:[%s217 + $0x20] sm:$0xf]
        %v1123 = vld [vmem:[%s217 + $0x24] sm:$0xf]
        %v1124 = vld [vmem:[%s217 + $0x28] sm:$0xf]
        %v1125 = vld [vmem:[%s217 + $0x2c] sm:$0xf]
        %v1126 = vld [vmem:[%s217 + $0x30] sm:$0x3]
        %s1127 = scalar_lea.vmem [#allocation2], 384
        %v1128 = vld [vmem:[%s1127] sm:$0xf]
        %v1129 = vld [vmem:[%s1127 + $0x4] sm:$0xf]
        %v1130 = vld [vmem:[%s1127 + $0x8] sm:$0xf]
        %v1131 = vld [vmem:[%s1127 + $0xc] sm:$0xf]
        %v1132 = vld [vmem:[%s1127 + $0x10] sm:$0xf]
        %v1133 = vld [vmem:[%s1127 + $0x14] sm:$0xf]
        %v1134 = vld [vmem:[%s1127 + $0x18] sm:$0xf]
        %v1135 = vld [vmem:[%s1127 + $0x1c] sm:$0xf]
        %v1136 = vld [vmem:[%s1127 + $0x20] sm:$0xf]
        %v1137 = vld [vmem:[%s1127 + $0x24] sm:$0xf]
        %v1138 = vld [vmem:[%s1127 + $0x28] sm:$0xf]
        %v1139 = vld [vmem:[%s1127 + $0x2c] sm:$0xf]
        %v1140 = vld [vmem:[%s1127 + $0x30] sm:$0xf]
        %v1141 = vld [vmem:[%s1127 + $0x34] sm:$0xf]
        %v1142 = vld [vmem:[%s1127 + $0x38] sm:$0xf]
        %v1143 = vld [vmem:[%s1127 + $0x3c] sm:$0xf]
        %v1155 = vunpack.c.l.b16 %v1116
        %v1156 = vunpack.c.l.b16 %v1117
        %v1157 = vunpack.c.l.b16 %v1118
        %v1158 = vunpack.c.l.b16 %v1119
        %v1159 = vunpack.c.l.b16 %v1120
        %v1160 = vunpack.c.l.b16 %v1121
        %v1161 = vunpack.c.l.b16 %v1122
        %v1162 = vunpack.c.l.b16 %v1123
        %v1163 = vunpack.c.l.b16 %v1124
        %v1164 = vunpack.c.l.b16 %v1125
        %v1165 = vunpack.c.l.b16 %v1126
        %v1166 = vpack.c.b16 %v1156, %v1155
        %v1167 = vpack.c.b16 %v1158, %v1157
        %v1168 = vpack.c.b16 %v1160, %v1159
        %v1169 = vpack.c.b16 %v1162, %v1161
        %v1170 = vpack.c.b16 %v1164, %v1163
        %v1171 = vpack.c.b16 %v1165, %v1165
        %v1172 = vrot.slane %v1166, 2
        %v1173 = vrot.slane %v1167, 2
        %v1174 = vsel %vm1007, %v1172, %v1173
        %v1175 = vrot.slane %v1168, 2
        %v1176 = vsel %vm1007, %v1173, %v1175
        %v1177 = vrot.slane %v1169, 2
        %v1178 = vsel %vm1007, %v1175, %v1177
        %v1179 = vrot.slane %v1170, 2
        %v1180 = vsel %vm1007, %v1177, %v1179
        %v1181 = vrot.slane %v1171, 2
        %v1182 = vsel %vm1007, %v1179, %v1181
        %v1204 = vunpack.c.l.b16 %v1128
        %v1205 = vunpack.c.l.b16 %v1129
        %v1206 = vunpack.c.l.b16 %v1130
        %v1207 = vunpack.c.l.b16 %v1131
        %v1208 = vunpack.c.l.b16 %v1132
        %v1209 = vunpack.c.l.b16 %v1133
        %v1210 = vunpack.c.l.b16 %v1134
        %v1211 = vunpack.c.l.b16 %v1135
        %v1212 = vunpack.c.l.b16 %v1136
        %v1213 = vunpack.c.l.b16 %v1137
        %v1214 = vunpack.c.l.b16 %v1138
        %v1215 = vunpack.c.l.b16 %v1139
        %v1216 = vunpack.c.l.b16 %v1140
        %v1217 = vunpack.c.l.b16 %v1141
        %v1218 = vunpack.c.l.b16 %v1142
        %v1219 = vunpack.c.l.b16 %v1143
        %v1220 = vpack.c.b16 %v1205, %v1204
        %v1221 = vpack.c.b16 %v1207, %v1206
        %v1222 = vpack.c.b16 %v1209, %v1208
        %v1223 = vpack.c.b16 %v1211, %v1210
        %v1224 = vpack.c.b16 %v1213, %v1212
        %v1225 = vpack.c.b16 %v1215, %v1214
        %v1226 = vpack.c.b16 %v1217, %v1216
        %v1227 = vpack.c.b16 %v1219, %v1218
        %1236 = vmatpush.bf16.msra.mxu0 %v1227
        %1237 = vmatpush.bf16.msra.mxu0 %v1226
        %1238 = vmatpush.bf16.msra.mxu0 %v1225
        %1239 = vmatpush.bf16.msra.mxu0 %v1224
        %1240 = vmatpush.bf16.msra.mxu0 %v1223
        %1241 = vmatpush.bf16.msra.mxu0 %v1222
        %1242 = vmatpush.bf16.msra.mxu0 %v1221
        %1243 = vmatpush.bf16.msra.mxu0 %v1220
        %1244 = vmatmul.bf16.gmra.mxu0 %v1174
        %v1245 = vpop.f32.mrf.mxu0
        %v1246 = vadd.f32 0.0, %v1245
        %v1247 = vpop.f32.mrf.mxu0
        %v1248 = vadd.f32 0.0, %v1247
        %1249 = vmatmul.bf16.gmra.mxu0 %v1176
        %v1250 = vpop.f32.mrf.mxu0
        %v1251 = vadd.f32 0.0, %v1250
        %v1252 = vpop.f32.mrf.mxu0
        %v1253 = vadd.f32 0.0, %v1252
        %1254 = vmatmul.bf16.gmra.mxu0 %v1178
        %v1255 = vpop.f32.mrf.mxu0
        %v1256 = vadd.f32 0.0, %v1255
        %v1257 = vpop.f32.mrf.mxu0
        %v1258 = vadd.f32 0.0, %v1257
        %1259 = vmatmul.bf16.gmra.mxu0 %v1180
        %v1260 = vpop.f32.mrf.mxu0
        %v1261 = vadd.f32 0.0, %v1260
        %v1262 = vpop.f32.mrf.mxu0
        %v1263 = vadd.f32 0.0, %v1262
        %1264 = vmatmul.bf16.gmra.mxu0 %v1182
        %v1265 = vpop.f32.mrf.mxu0
        %v1266 = vadd.f32 0.0, %v1265
        %v1267 = vpop.f32.mrf.mxu0
        %v1268 = vadd.f32 0.0, %v1267
        %1269 = vdwg.mxu0
        %v1270 = vadd.f32 %v1106, %v1246
        %v1271 = vadd.f32 %v1107, %v1248
        %v1272 = vadd.f32 %v1108, %v1251
        %v1273 = vadd.f32 %v1109, %v1253
        %v1274 = vadd.f32 %v1110, %v1256
        %v1275 = vadd.f32 %v1111, %v1258
        %v1276 = vadd.f32 %v1112, %v1261
        %v1277 = vadd.f32 %v1113, %v1263
        %v1278 = vadd.f32 %v1114, %v1266
        %v1279 = vadd.f32 %v1115, %v1268
        %v1280 = vld [vmem:[%s217 + $0x30] sm:$0x7]
        %s1281 = scalar_lea.vmem [#allocation2], 448
        %v1282 = vld [vmem:[%s1281] sm:$0xf]
        %v1283 = vld [vmem:[%s1281 + $0x4] sm:$0xf]
        %v1284 = vld [vmem:[%s1281 + $0x8] sm:$0xf]
        %v1285 = vld [vmem:[%s1281 + $0xc] sm:$0xf]
        %v1286 = vld [vmem:[%s1281 + $0x10] sm:$0xf]
        %v1287 = vld [vmem:[%s1281 + $0x14] sm:$0xf]
        %v1288 = vld [vmem:[%s1281 + $0x18] sm:$0xf]
        %v1289 = vld [vmem:[%s1281 + $0x1c] sm:$0xf]
        %v1290 = vld [vmem:[%s1281 + $0x20] sm:$0xf]
        %v1291 = vld [vmem:[%s1281 + $0x24] sm:$0xf]
        %v1292 = vld [vmem:[%s1281 + $0x28] sm:$0xf]
        %v1293 = vld [vmem:[%s1281 + $0x2c] sm:$0xf]
        %v1294 = vld [vmem:[%s1281 + $0x30] sm:$0xf]
        %v1295 = vld [vmem:[%s1281 + $0x34] sm:$0xf]
        %v1296 = vld [vmem:[%s1281 + $0x38] sm:$0xf]
        %v1297 = vld [vmem:[%s1281 + $0x3c] sm:$0xf]
        %v1299 = vunpack.c.l.b16 %v1280
        %v1300 = vpack.c.b16 %v1299, %v1299
        %vm1301 = vsmask.f32 5376
        %v1303 = vshrl.u32 %v1166, 16
        %v1305 = vrot.slane %v1303, 2
        %v1306 = vshll.u32 %v1166, 16
        %v1308 = vrot.slane %v1306, 3
        %v1309 = vor.u32 %v1305, %v1308
        %v1311 = vshrl.u32 %v1167, 16
        %v1313 = vrot.slane %v1311, 2
        %v1314 = vshll.u32 %v1167, 16
        %v1316 = vrot.slane %v1314, 3
        %v1317 = vor.u32 %v1313, %v1316
        %v1318 = vsel %vm1301, %v1309, %v1317
        %v1320 = vshrl.u32 %v1168, 16
        %v1322 = vrot.slane %v1320, 2
        %v1323 = vshll.u32 %v1168, 16
        %v1325 = vrot.slane %v1323, 3
        %v1326 = vor.u32 %v1322, %v1325
        %v1327 = vsel %vm1301, %v1317, %v1326
        %v1329 = vshrl.u32 %v1169, 16
        %v1331 = vrot.slane %v1329, 2
        %v1332 = vshll.u32 %v1169, 16
        %v1334 = vrot.slane %v1332, 3
        %v1335 = vor.u32 %v1331, %v1334
        %v1336 = vsel %vm1301, %v1326, %v1335
        %v1338 = vshrl.u32 %v1170, 16
        %v1340 = vrot.slane %v1338, 2
        %v1341 = vshll.u32 %v1170, 16
        %v1343 = vrot.slane %v1341, 3
        %v1344 = vor.u32 %v1340, %v1343
        %v1345 = vsel %vm1301, %v1335, %v1344
        %v1347 = vshrl.u32 %v1300, 16
        %v1349 = vrot.slane %v1347, 2
        %v1350 = vshll.u32 %v1300, 16
        %v1352 = vrot.slane %v1350, 3
        %v1353 = vor.u32 %v1349, %v1352
        %v1354 = vsel %vm1301, %v1344, %v1353
        %v1376 = vunpack.c.l.b16 %v1282
        %v1377 = vunpack.c.l.b16 %v1283
        %v1378 = vunpack.c.l.b16 %v1284
        %v1379 = vunpack.c.l.b16 %v1285
        %v1380 = vunpack.c.l.b16 %v1286
        %v1381 = vunpack.c.l.b16 %v1287
        %v1382 = vunpack.c.l.b16 %v1288
        %v1383 = vunpack.c.l.b16 %v1289
        %v1384 = vunpack.c.l.b16 %v1290
        %v1385 = vunpack.c.l.b16 %v1291
        %v1386 = vunpack.c.l.b16 %v1292
        %v1387 = vunpack.c.l.b16 %v1293
        %v1388 = vunpack.c.l.b16 %v1294
        %v1389 = vunpack.c.l.b16 %v1295
        %v1390 = vunpack.c.l.b16 %v1296
        %v1391 = vunpack.c.l.b16 %v1297
        %v1392 = vpack.c.b16 %v1377, %v1376
        %v1393 = vpack.c.b16 %v1379, %v1378
        %v1394 = vpack.c.b16 %v1381, %v1380
        %v1395 = vpack.c.b16 %v1383, %v1382
        %v1396 = vpack.c.b16 %v1385, %v1384
        %v1397 = vpack.c.b16 %v1387, %v1386
        %v1398 = vpack.c.b16 %v1389, %v1388
        %v1399 = vpack.c.b16 %v1391, %v1390
        %1408 = vmatpush.bf16.msra.mxu0 %v1399
        %1409 = vmatpush.bf16.msra.mxu0 %v1398
        %1410 = vmatpush.bf16.msra.mxu0 %v1397
        %1411 = vmatpush.bf16.msra.mxu0 %v1396
        %1412 = vmatpush.bf16.msra.mxu0 %v1395
        %1413 = vmatpush.bf16.msra.mxu0 %v1394
        %1414 = vmatpush.bf16.msra.mxu0 %v1393
        %1415 = vmatpush.bf16.msra.mxu0 %v1392
        %1416 = vmatmul.bf16.gmra.mxu0 %v1318
        %v1417 = vpop.f32.mrf.mxu0
        %v1418 = vadd.f32 0.0, %v1417
        %v1419 = vpop.f32.mrf.mxu0
        %v1420 = vadd.f32 0.0, %v1419
        %1421 = vmatmul.bf16.gmra.mxu0 %v1327
        %v1422 = vpop.f32.mrf.mxu0
        %v1423 = vadd.f32 0.0, %v1422
        %v1424 = vpop.f32.mrf.mxu0
        %v1425 = vadd.f32 0.0, %v1424
        %1426 = vmatmul.bf16.gmra.mxu0 %v1336
        %v1427 = vpop.f32.mrf.mxu0
        %v1428 = vadd.f32 0.0, %v1427
        %v1429 = vpop.f32.mrf.mxu0
        %v1430 = vadd.f32 0.0, %v1429
        %1431 = vmatmul.bf16.gmra.mxu0 %v1345
        %v1432 = vpop.f32.mrf.mxu0
        %v1433 = vadd.f32 0.0, %v1432
        %v1434 = vpop.f32.mrf.mxu0
        %v1435 = vadd.f32 0.0, %v1434
        %1436 = vmatmul.bf16.gmra.mxu0 %v1354
        %v1437 = vpop.f32.mrf.mxu0
        %v1438 = vadd.f32 0.0, %v1437
        %v1439 = vpop.f32.mrf.mxu0
        %v1440 = vadd.f32 0.0, %v1439
        %1441 = vdwg.mxu0
        %v1442 = vadd.f32 %v1270, %v1418
        %v1443 = vadd.f32 %v1271, %v1420
        %v1444 = vadd.f32 %v1272, %v1423
        %v1445 = vadd.f32 %v1273, %v1425
        %v1446 = vadd.f32 %v1274, %v1428
        %v1447 = vadd.f32 %v1275, %v1430
        %v1448 = vadd.f32 %v1276, %v1433
        %v1449 = vadd.f32 %v1277, %v1435
        %v1450 = vadd.f32 %v1278, %v1438
        %v1451 = vadd.f32 %v1279, %v1440
        %v1452 = vld [vmem:[%s217 + $0x8] sm:$0x8]
        %s1453 = scalar_lea.vmem [#allocation2], 512
        %v1454 = vld [vmem:[%s1453] sm:$0xf]
        %v1455 = vld [vmem:[%s1453 + $0x4] sm:$0xf]
        %v1456 = vld [vmem:[%s1453 + $0x8] sm:$0xf]
        %v1457 = vld [vmem:[%s1453 + $0xc] sm:$0xf]
        %v1458 = vld [vmem:[%s1453 + $0x10] sm:$0xf]
        %v1459 = vld [vmem:[%s1453 + $0x14] sm:$0xf]
        %v1460 = vld [vmem:[%s1453 + $0x18] sm:$0xf]
        %v1461 = vld [vmem:[%s1453 + $0x1c] sm:$0xf]
        %v1462 = vld [vmem:[%s1453 + $0x20] sm:$0xf]
        %v1463 = vld [vmem:[%s1453 + $0x24] sm:$0xf]
        %v1464 = vld [vmem:[%s1453 + $0x28] sm:$0xf]
        %v1465 = vld [vmem:[%s1453 + $0x2c] sm:$0xf]
        %v1466 = vld [vmem:[%s1453 + $0x30] sm:$0xf]
        %v1467 = vld [vmem:[%s1453 + $0x34] sm:$0xf]
        %v1468 = vld [vmem:[%s1453 + $0x38] sm:$0xf]
        %v1469 = vld [vmem:[%s1453 + $0x3c] sm:$0xf]
        %v1471 = vunpack.c.l.b16 %v1452
        %v1472 = vpack.c.b16 %v1156, %v1471
        %vm1473 = vcmask 1044480
        %v1474 = vrot.slane %v1472, 3
        %v1475 = vrot.slane %v1167, 3
        %v1476 = vsel %vm1473, %v1474, %v1475
        %v1477 = vrot.slane %v1168, 3
        %v1478 = vsel %vm1473, %v1475, %v1477
        %v1479 = vrot.slane %v1169, 3
        %v1480 = vsel %vm1473, %v1477, %v1479
        %v1481 = vrot.slane %v1170, 3
        %v1482 = vsel %vm1473, %v1479, %v1481
        %v1483 = vrot.slane %v1300, 3
        %v1484 = vsel %vm1473, %v1481, %v1483
        %v1506 = vunpack.c.l.b16 %v1454
        %v1507 = vunpack.c.l.b16 %v1455
        %v1508 = vunpack.c.l.b16 %v1456
        %v1509 = vunpack.c.l.b16 %v1457
        %v1510 = vunpack.c.l.b16 %v1458
        %v1511 = vunpack.c.l.b16 %v1459
        %v1512 = vunpack.c.l.b16 %v1460
        %v1513 = vunpack.c.l.b16 %v1461
        %v1514 = vunpack.c.l.b16 %v1462
        %v1515 = vunpack.c.l.b16 %v1463
        %v1516 = vunpack.c.l.b16 %v1464
        %v1517 = vunpack.c.l.b16 %v1465
        %v1518 = vunpack.c.l.b16 %v1466
        %v1519 = vunpack.c.l.b16 %v1467
        %v1520 = vunpack.c.l.b16 %v1468
        %v1521 = vunpack.c.l.b16 %v1469
        %v1522 = vpack.c.b16 %v1507, %v1506
        %v1523 = vpack.c.b16 %v1509, %v1508
        %v1524 = vpack.c.b16 %v1511, %v1510
        %v1525 = vpack.c.b16 %v1513, %v1512
        %v1526 = vpack.c.b16 %v1515, %v1514
        %v1527 = vpack.c.b16 %v1517, %v1516
        %v1528 = vpack.c.b16 %v1519, %v1518
        %v1529 = vpack.c.b16 %v1521, %v1520
        %1538 = vmatpush.bf16.msra.mxu0 %v1529
        %1539 = vmatpush.bf16.msra.mxu0 %v1528
        %1540 = vmatpush.bf16.msra.mxu0 %v1527
        %1541 = vmatpush.bf16.msra.mxu0 %v1526
        %1542 = vmatpush.bf16.msra.mxu0 %v1525
        %1543 = vmatpush.bf16.msra.mxu0 %v1524
        %1544 = vmatpush.bf16.msra.mxu0 %v1523
        %1545 = vmatpush.bf16.msra.mxu0 %v1522
        %1546 = vmatmul.bf16.gmra.mxu0 %v1476
        %v1547 = vpop.f32.mrf.mxu0
        %v1548 = vadd.f32 0.0, %v1547
        %v1549 = vpop.f32.mrf.mxu0
        %v1550 = vadd.f32 0.0, %v1549
        %1551 = vmatmul.bf16.gmra.mxu0 %v1478
        %v1552 = vpop.f32.mrf.mxu0
        %v1553 = vadd.f32 0.0, %v1552
        %v1554 = vpop.f32.mrf.mxu0
        %v1555 = vadd.f32 0.0, %v1554
        %1556 = vmatmul.bf16.gmra.mxu0 %v1480
        %v1557 = vpop.f32.mrf.mxu0
        %v1558 = vadd.f32 0.0, %v1557
        %v1559 = vpop.f32.mrf.mxu0
        %v1560 = vadd.f32 0.0, %v1559
        %1561 = vmatmul.bf16.gmra.mxu0 %v1482
        %v1562 = vpop.f32.mrf.mxu0
        %v1563 = vadd.f32 0.0, %v1562
        %v1564 = vpop.f32.mrf.mxu0
        %v1565 = vadd.f32 0.0, %v1564
        %1566 = vmatmul.bf16.gmra.mxu0 %v1484
        %v1567 = vpop.f32.mrf.mxu0
        %v1568 = vadd.f32 0.0, %v1567
        %v1569 = vpop.f32.mrf.mxu0
        %v1570 = vadd.f32 0.0, %v1569
        %1571 = vdwg.mxu0
        %v1572 = vadd.f32 %v1442, %v1548
        %v1573 = vadd.f32 %v1443, %v1550
        %v1574 = vadd.f32 %v1444, %v1553
        %v1575 = vadd.f32 %v1445, %v1555
        %v1576 = vadd.f32 %v1446, %v1558
        %v1577 = vadd.f32 %v1447, %v1560
        %v1578 = vadd.f32 %v1448, %v1563
        %v1579 = vadd.f32 %v1449, %v1565
        %v1580 = vadd.f32 %v1450, %v1568
        %v1581 = vadd.f32 %v1451, %v1570
        %v1582 = vld [vmem:[%s220] sm:$0x1]
        %v1584 = vperm.slane %v1582, 0
        %v1586 = vadd.f32 %v1572, %v1584
        %v1587 = vadd.f32 %v1573, %v1584
        %v1588 = vadd.f32 %v1574, %v1584
        %v1589 = vadd.f32 %v1575, %v1584
        %v1590 = vadd.f32 %v1576, %v1584
        %v1591 = vadd.f32 %v1577, %v1584
        %v1592 = vadd.f32 %v1578, %v1584
        %v1593 = vadd.f32 %v1579, %v1584
        %v1594 = vadd.f32 %v1580, %v1584
        %v1595 = vadd.f32 %v1581, %v1584
        %v1596 = vmax.f32 %v1586, 0.0
        %v1597 = vmax.f32 %v1587, 0.0
        %v1598 = vmax.f32 %v1588, 0.0
        %v1599 = vmax.f32 %v1589, 0.0
        %v1600 = vmax.f32 %v1590, 0.0
        %v1601 = vmax.f32 %v1591, 0.0
        %v1602 = vmax.f32 %v1592, 0.0
        %v1603 = vmax.f32 %v1593, 0.0
        %v1604 = vmax.f32 %v1594, 0.0
        %v1605 = vmax.f32 %v1595, 0.0
        %v1606 = vpack.c.bf16 %v1596, %v1596
        %v1607 = vpack.c.bf16 %v1597, %v1597
        %v1608 = vpack.c.bf16 %v1598, %v1598
        %v1609 = vpack.c.bf16 %v1599, %v1599
        %v1610 = vpack.c.bf16 %v1600, %v1600
        %v1611 = vpack.c.bf16 %v1601, %v1601
        %v1612 = vpack.c.bf16 %v1602, %v1602
        %v1613 = vpack.c.bf16 %v1603, %v1603
        %v1614 = vpack.c.bf16 %v1604, %v1604
        %v1615 = vpack.c.bf16 %v1605, %v1605
        %1616 = vst [vmem:[%s228] sm:$0xf] %v1606
        %1617 = vst [vmem:[%s228 + $0x4] sm:$0xf] %v1607
        %1618 = vst [vmem:[%s228 + $0x8] sm:$0xf] %v1608
        %1619 = vst [vmem:[%s228 + $0xc] sm:$0xf] %v1609
        %1620 = vst [vmem:[%s228 + $0x10] sm:$0xf] %v1610
        %1621 = vst [vmem:[%s228 + $0x14] sm:$0xf] %v1611
        %1622 = vst [vmem:[%s228 + $0x18] sm:$0xf] %v1612
        %1623 = vst [vmem:[%s228 + $0x1c] sm:$0xf] %v1613
        %1624 = vst [vmem:[%s228 + $0x20] sm:$0xf] %v1614
        %1625 = vst [vmem:[%s228 + $0x24] sm:$0xf] %v1615
        %p1626 = scmp.lt.s32.totalorder %s19, 1
        %s1627 = scalar_select %p1626, %s19, 1
        %p1628 = scmp.lt.s32.totalorder %s20, 0
        %s1629 = scalar_select %p1628, %s20, 0
        %s1630 = smul.addr %s1627, 10
        %s1631 = sadd.s32 %s1629, %s1630
        %s1632 = smul.addr %s1631, 4
        %s1633 = scalar_lea.vmem %s3, %s1632
        // Predicated region
        $region37: #{_lambda_.1} parent=31 // pred_check
          %p1634 = pneg %p125
        $region38: #{_lambda_.1} parent=31 // pred_check_branch
          %1636 = sbr.rel (%p1634) target = $region40
        $region39: #{_lambda_.1} parent=31 // pred_region
          _
        $region40: #{_lambda_.1} parent=31 // pred_fallthru
          _
      $region32: #{_lambda_.1} parent=5 // pred_fallthru
        _
      %p1637 = scmp.le.s32.totalorder 2, %s10
      // Predicated region
      $region41: #{_lambda_.1} parent=5 // pred_check
        %p1638 = pneg %p1637
      $region42: #{_lambda_.1} parent=5 // pred_check_branch
        %1640 = sbr.rel (%p1638) target = $region44
      $region43: #{_lambda_.1} parent=5 // pred_region
        %s1641 = ssub.s32 %s10, 2
        // Predicated region
        $region45: #{_lambda_.1} parent=43 // pred_check
          %p1642 = pneg %p131
        $region46: #{_lambda_.1} parent=43 // pred_check_branch
          %1644 = sbr.rel (%p1642) target = $region48
        $region47: #{_lambda_.1} parent=43 // pred_region
          %p1645 = scmp.lt.s32.totalorder %s21, 1
          %s1646 = scalar_select %p1645, %s21, 1
          %p1647 = scmp.lt.s32.totalorder %s22, 0
          %s1648 = scalar_select %p1647, %s22, 0
          %s1649 = smul.addr %s1646, 10
          %s1650 = sadd.s32 %s1648, %s1649
          %s1651 = smul.addr %s1650, 4
          %s1652 = scalar_lea.vmem %s3, %s1651
        $region48: #{_lambda_.1} parent=43 // pred_fallthru
          _
      $region44: #{_lambda_.1} parent=5 // pred_fallthru
        _
    $region6: #{_lambda_.1} parent=1 // loop_footer
      %s14 = sadd.s32 1, %s10
    $region7: #{_lambda_.1} parent=1 // loop_footer_branch
      %9 = sbr.rel target = $region3
    $region8: #{_lambda_.1} parent=1 // loop_exit
      _
    %1653 = vsyncpa [#allocation3], 1
    %s1654 = scalar_lea.sflag [#allocation3], 1
    %1655 = vsyncpa %s1654, 1

</llo_original>
